<compile_context>
chip_gen: v7x
topology: tpu7x:2x2x1
jax: 0.10.0
libtpu: 0.0.40
codegen_flags: <defaults>
</compile_context>

<pallas_src>
import functools

import jax
import jax.numpy as jnp
from jax.experimental import pallas as pl
from jax.experimental.pallas import tpu as pltpu


# ------------------------- fused Pallas kernel -------------------------

def _fused_conv_bn_relu_kernel(x_ref, w_ref, gamma_ref, beta_ref, out_ref,
                               pad_ref, sum_ref, sumsq_ref, *, eps):
    """Per-image 3x3 conv (pad=1) + BN batch-stat accumulation + fused epilogue.

    x_ref:     (C_in, H, W)        unpadded NCHW image block (VMEM)
    w_ref:     (C_out, 9*C_in)     weights, K index order = (kh, kw, c_in)
    gamma_ref: (C_out, 1)
    beta_ref:  (C_out, 1)
    out_ref:   (N, C_out, H*W)     whole-batch output, resident in VMEM across
                                   the grid (constant-index output block)
    pad_ref:   (C_in, H+2, W+2)    zero-padded image scratch
    sum_ref:   (C_out, 1)          per-channel running sum over all pixels
    sumsq_ref: (C_out, 1)          per-channel running sum of squares
    """
    n = pl.program_id(0)
    num_imgs = pl.num_programs(0)
    c_in, H, W = x_ref.shape
    c_out = out_ref.shape[1]

    @pl.when(n == 0)
    def _init():
        pad_ref[...] = jnp.zeros_like(pad_ref)     # borders stay zero forever
        sum_ref[...] = jnp.zeros_like(sum_ref)
        sumsq_ref[...] = jnp.zeros_like(sumsq_ref)

    # In-kernel zero padding: write the image into the interior of the scratch.
    pad_ref[:, 1:H + 1, 1:W + 1] = x_ref[...]
    xp = pad_ref[...]                               # (C_in, H+2, W+2)

    # Build the K-folded patch (9*C_in, H*W) and do ONE MXU matmul with
    # K = 9*C_in, result directly in lane-dense (C_out, H*W) orientation.
    cols = []
    for kh in range(3):
        for kw in range(3):
            cols.append(xp[:, kh:kh + H, kw:kw + W].reshape(c_in, H * W))
    patch = jnp.concatenate(cols, axis=0)           # (9*C_in, H*W)

    conv = jax.lax.dot_general(
        w_ref[...], patch,
        dimension_numbers=(((1,), (0,)), ((), ())),
        preferred_element_type=jnp.float32)         # (C_out, H*W)

    # BN partial statistics while the tile is in VMEM (no extra HBM pass).
    sum_ref[...] += jnp.sum(conv, axis=1, keepdims=True)
    sumsq_ref[...] += jnp.sum(conv * conv, axis=1, keepdims=True)

    # Stash the conv result into the VMEM-resident output block.
    out_ref[n] = conv

    # Final grid phase: finish batch statistics and apply BN affine + ReLU
    # in-place over the whole resident output — written to HBM exactly once.
    @pl.when(n == num_imgs - 1)
    def _finalize():
        count = jnp.float32(out_ref.shape[0] * out_ref.shape[2])
        mean = sum_ref[...] / count                              # (C_out, 1)
        var = jnp.maximum(sumsq_ref[...] / count - mean * mean, 0.0)
        inv_std = jax.lax.rsqrt(var + eps)
        g = gamma_ref[...]
        scale = (g * inv_std).reshape(1, c_out, 1)
        shift = (beta_ref[...] - mean * g * inv_std).reshape(1, c_out, 1)
        out_ref[...] = jnp.maximum(out_ref[...] * scale + shift, 0.0)


# ------------------------- wrapper -------------------------

def conv_block22_forward(x, weight, bias, gamma, beta, eps=1e-5):
    """x: (N, C_in, H, W); weight: (C_out, C_in, 3, 3); bias/gamma/beta: (C_out,)."""
    N, C_in, H, W = x.shape
    C_out = weight.shape[0]
    HW = H * W

    # NOTE: `bias` is intentionally unused — a per-channel constant added
    # before TRAIN-mode BatchNorm cancels exactly in (x - mean)/std, so the
    # forward output is identical.  (Does NOT hold for eval-mode running stats.)
    del bias

    x = x.astype(jnp.float32)
    # (C_out, C_in, 3, 3) -> (C_out, kh, kw, C_in) -> (C_out, 9*C_in);
    # the K-index order (kh, kw, c_in) must match the patch built in-kernel.
    w2 = jnp.transpose(weight.astype(jnp.float32), (0, 2, 3, 1)).reshape(
        C_out, 9 * C_in)
    gamma2 = gamma.astype(jnp.float32).reshape(C_out, 1)
    beta2 = beta.astype(jnp.float32).reshape(C_out, 1)

    kernel = functools.partial(_fused_conv_bn_relu_kernel, eps=float(eps))

    y = pl.pallas_call(
        kernel,
        out_shape=jax.ShapeDtypeStruct((N, C_out, HW), jnp.float32),
        grid_spec=pltpu.PrefetchScalarGridSpec(
            num_scalar_prefetch=0,
            grid=(N,),
            in_specs=[
                pl.BlockSpec((None, C_in, H, W), lambda n: (n, 0, 0, 0)),
                pl.BlockSpec((C_out, 9 * C_in), lambda n: (0, 0)),
                pl.BlockSpec((C_out, 1), lambda n: (0, 0)),
                pl.BlockSpec((C_out, 1), lambda n: (0, 0)),
            ],
            # Full-array output block with a constant index map: the output
            # stays resident in VMEM across the whole batch axis and is
            # flushed to HBM once, after the in-kernel BN/ReLU epilogue.
            out_specs=pl.BlockSpec((N, C_out, HW), lambda n: (0, 0, 0)),
            scratch_shapes=[
                pltpu.VMEM((C_in, H + 2, W + 2), jnp.float32),  # padded image
                pltpu.VMEM((C_out, 1), jnp.float32),            # channel sum
                pltpu.VMEM((C_out, 1), jnp.float32),            # channel sumsq
            ],
        ),
        compiler_params=pltpu.CompilerParams(
            # Batch axis carries the BN-stat reduction and the VMEM-resident
            # output block -> must run sequentially.
            dimension_semantics=("arbitrary",)),
    )(x, w2, gamma2, beta2)

    # (N, C_out, H*W) -> (N, C_out, H, W): contiguous reshape, no data movement.
    return y.reshape(N, C_out, H, W)


# ------------------------- reference (pure JAX) -------------------------

def _reference(x, weight, bias, gamma, beta, eps=1e-5):
    conv = jax.lax.conv_general_dilated(
        x, weight, window_strides=(1, 1), padding=((1, 1), (1, 1)),
        dimension_numbers=("NCHW", "OIHW", "NCHW"))
    conv = conv + bias.reshape(1, -1, 1, 1)
    mean = jnp.mean(conv, axis=(0, 2, 3), keepdims=True)
    var = jnp.var(conv, axis=(0, 2, 3), keepdims=True)       # biased (ddof=0)
    xh = (conv - mean) / jnp.sqrt(var + eps)
    return jnp.maximum(
        xh * gamma.reshape(1, -1, 1, 1) + beta.reshape(1, -1, 1, 1), 0.0)


# ------------------------- main -------------------------

if __name__ == "__main__":
    key = jax.random.PRNGKey(0)
    N, C_in, C_out, H, W = 2, 4, 8, 16, 16

    k1, k2, k3 = jax.random.split(key, 3)
    x = jax.random.normal(k1, (N, C_in, H, W), dtype=jnp.float32)

    # Deterministic parameter init (Kaiming-uniform-like bound for conv weight)
    fan_in = C_in * 3 * 3
    bound = 1.0 / (fan_in ** 0.5)
    weight = jax.random.uniform(k2, (C_out, C_in, 3, 3),
                                minval=-bound, maxval=bound, dtype=jnp.float32)
    bias = jax.random.uniform(k3, (C_out,),
                              minval=-bound, maxval=bound, dtype=jnp.float32)
    gamma = jnp.ones((C_out,), jnp.float32)   # BatchNorm2d default affine init
    beta = jnp.zeros((C_out,), jnp.float32)

    fwd = jax.jit(conv_block22_forward)
    out = fwd(x, weight, bias, gamma, beta)
    out = jax.block_until_ready(out)

    # Sanity + correctness checks against the full PyTorch-equivalent reference
    # (reference includes the conv bias; it cancels under train-mode BN).
    assert out.shape == (N, C_out, H, W)
    assert bool(jnp.all(out >= 0.0))
    ref = _reference(x, weight, bias, gamma, beta)
    max_err = float(jnp.max(jnp.abs(out - ref)))
    assert max_err < 1e-3, f"max abs error vs reference: {max_err}"

    print("KERNEL_OK")
</pallas_src>

<mosaic_0001>
module attributes {stable_mosaic.version = 11 : i64} {
  func.func @_fused_conv_bn_relu_kernel(%arg0: i32, %arg1: memref<1x4x16x16xf32, #tpu.memory_space<vmem>>, %arg2: memref<8x36xf32, #tpu.memory_space<vmem>>, %arg3: memref<8x1xf32, #tpu.memory_space<vmem>>, %arg4: memref<8x1xf32, #tpu.memory_space<vmem>>, %arg5: memref<2x8x256xf32, #tpu.memory_space<vmem>>, %arg6: memref<4x18x18xf32, #tpu.memory_space<vmem>>, %arg7: memref<8x1xf32, #tpu.memory_space<vmem>>, %arg8: memref<8x1xf32, #tpu.memory_space<vmem>>) attributes {dimension_semantics = [#tpu.dimension_semantics<arbitrary>], iteration_bounds = array<i64: 2>, scalar_prefetch = 0 : i64, scratch_operands = 3 : i64, tpu.core_type = #tpu.core_type<tc>, window_params = [{transform_indices = @transform_0, window_bounds = array<i64: 1, 4, 16, 16>}, {pipeline_mode = #tpu.pipeline_mode<synchronous>, transform_indices = @transform_1, window_bounds = array<i64: 8, 36>}, {pipeline_mode = #tpu.pipeline_mode<synchronous>, transform_indices = @transform_2, window_bounds = array<i64: 8, 1>}, {pipeline_mode = #tpu.pipeline_mode<synchronous>, transform_indices = @transform_3, window_bounds = array<i64: 8, 1>}, {pipeline_mode = #tpu.pipeline_mode<synchronous>, transform_indices = @transform_4, window_bounds = array<i64: 2, 8, 256>}]} {
    %c0_i32 = arith.constant 0 : i32
    %0 = arith.cmpi eq, %arg0, %c0_i32 : i32
    %1 = arith.extui %0 : i1 to i32
    %c0_i32_0 = arith.constant 0 : i32
    %2 = arith.cmpi ne, %1, %c0_i32_0 : i32
    scf.if %2 {
      %cst_24 = arith.constant 0.000000e+00 : f32
      %46 = vector.broadcast %cst_24 : f32 to vector<4x18x18xf32>
      %c0_25 = arith.constant 0 : index
      %c0_26 = arith.constant 0 : index
      %c0_27 = arith.constant 0 : index
      %47 = vector.load %arg6[%c0_25, %c0_26, %c0_27] : memref<4x18x18xf32, #tpu.memory_space<vmem>>, vector<4x18x18xf32>
      tpu.vector_store %arg6[%c0_25, %c0_26, %c0_27], %46 {strides = array<i32>} : memref<4x18x18xf32, #tpu.memory_space<vmem>>, vector<4x18x18xf32>,
      %cst_28 = arith.constant 0.000000e+00 : f32
      %48 = vector.broadcast %cst_28 : f32 to vector<8x1xf32>
      %c0_29 = arith.constant 0 : index
      %c0_30 = arith.constant 0 : index
      %49 = vector.load %arg7[%c0_29, %c0_30] : memref<8x1xf32, #tpu.memory_space<vmem>>, vector<8x1xf32>
      tpu.vector_store %arg7[%c0_29, %c0_30], %48 {strides = array<i32>} : memref<8x1xf32, #tpu.memory_space<vmem>>, vector<8x1xf32>,
      %cst_31 = arith.constant 0.000000e+00 : f32
      %50 = vector.broadcast %cst_31 : f32 to vector<8x1xf32>
      %c0_32 = arith.constant 0 : index
      %c0_33 = arith.constant 0 : index
      %51 = vector.load %arg8[%c0_32, %c0_33] : memref<8x1xf32, #tpu.memory_space<vmem>>, vector<8x1xf32>
      tpu.vector_store %arg8[%c0_32, %c0_33], %50 {strides = array<i32>} : memref<8x1xf32, #tpu.memory_space<vmem>>, vector<8x1xf32>,
    } else {
    }
    %c0 = arith.constant 0 : index
    %c0_1 = arith.constant 0 : index
    %c0_2 = arith.constant 0 : index
    %c0_3 = arith.constant 0 : index
    %3 = vector.load %arg1[%c0, %c0_1, %c0_2, %c0_3] : memref<1x4x16x16xf32, #tpu.memory_space<vmem>>, vector<1x4x16x16xf32>
    %4 = vector.shape_cast %3 : vector<1x4x16x16xf32> to vector<4x16x16xf32>
    %c0_4 = arith.constant 0 : index
    %c1 = arith.constant 1 : index
    %c1_5 = arith.constant 1 : index
    %5 = vector.load %arg6[%c0_4, %c1, %c1_5] : memref<4x18x18xf32, #tpu.memory_space<vmem>>, vector<4x16x16xf32>
    tpu.vector_store %arg6[%c0_4, %c1, %c1_5], %4 {strides = array<i32>} : memref<4x18x18xf32, #tpu.memory_space<vmem>>, vector<4x16x16xf32>,
    %c0_6 = arith.constant 0 : index
    %c0_7 = arith.constant 0 : index
    %c0_8 = arith.constant 0 : index
    %6 = vector.load %arg6[%c0_6, %c0_7, %c0_8] : memref<4x18x18xf32, #tpu.memory_space<vmem>>, vector<4x18x18xf32>
    %7 = vector.extract_strided_slice %6 {offsets = [0, 0, 0], sizes = [4, 16, 16], strides = [1, 1, 1]} : vector<4x18x18xf32> to vector<4x16x16xf32>
    %8 = vector.shape_cast %7 : vector<4x16x16xf32> to vector<4x256xf32>
    %9 = vector.extract_strided_slice %6 {offsets = [0, 0, 1], sizes = [4, 16, 16], strides = [1, 1, 1]} : vector<4x18x18xf32> to vector<4x16x16xf32>
    %10 = vector.shape_cast %9 : vector<4x16x16xf32> to vector<4x256xf32>
    %11 = vector.extract_strided_slice %6 {offsets = [0, 0, 2], sizes = [4, 16, 16], strides = [1, 1, 1]} : vector<4x18x18xf32> to vector<4x16x16xf32>
    %12 = vector.shape_cast %11 : vector<4x16x16xf32> to vector<4x256xf32>
    %13 = vector.extract_strided_slice %6 {offsets = [0, 1, 0], sizes = [4, 16, 16], strides = [1, 1, 1]} : vector<4x18x18xf32> to vector<4x16x16xf32>
    %14 = vector.shape_cast %13 : vector<4x16x16xf32> to vector<4x256xf32>
    %15 = vector.extract_strided_slice %6 {offsets = [0, 1, 1], sizes = [4, 16, 16], strides = [1, 1, 1]} : vector<4x18x18xf32> to vector<4x16x16xf32>
    %16 = vector.shape_cast %15 : vector<4x16x16xf32> to vector<4x256xf32>
    %17 = vector.extract_strided_slice %6 {offsets = [0, 1, 2], sizes = [4, 16, 16], strides = [1, 1, 1]} : vector<4x18x18xf32> to vector<4x16x16xf32>
    %18 = vector.shape_cast %17 : vector<4x16x16xf32> to vector<4x256xf32>
    %19 = vector.extract_strided_slice %6 {offsets = [0, 2, 0], sizes = [4, 16, 16], strides = [1, 1, 1]} : vector<4x18x18xf32> to vector<4x16x16xf32>
    %20 = vector.shape_cast %19 : vector<4x16x16xf32> to vector<4x256xf32>
    %21 = vector.extract_strided_slice %6 {offsets = [0, 2, 1], sizes = [4, 16, 16], strides = [1, 1, 1]} : vector<4x18x18xf32> to vector<4x16x16xf32>
    %22 = vector.shape_cast %21 : vector<4x16x16xf32> to vector<4x256xf32>
    %23 = vector.extract_strided_slice %6 {offsets = [0, 2, 2], sizes = [4, 16, 16], strides = [1, 1, 1]} : vector<4x18x18xf32> to vector<4x16x16xf32>
    %24 = vector.shape_cast %23 : vector<4x16x16xf32> to vector<4x256xf32>
    %25 = tpu.concatenate %8, %10, %12, %14, %16, %18, %20, %22, %24 in 0 : vector<4x256xf32>, vector<4x256xf32>, vector<4x256xf32>, vector<4x256xf32>, vector<4x256xf32>, vector<4x256xf32>, vector<4x256xf32>, vector<4x256xf32>, vector<4x256xf32> -> vector<36x256xf32>
    %c0_9 = arith.constant 0 : index
    %c0_10 = arith.constant 0 : index
    %26 = vector.load %arg2[%c0_9, %c0_10] : memref<8x36xf32, #tpu.memory_space<vmem>>, vector<8x36xf32>
    %cst = arith.constant dense<0.000000e+00> : vector<8x256xf32>
    %27 = tpu.matmul %26, %25, %cst {dimension_numbers = #tpu.dot_dimension_numbers<[1], [0], [0], [1], [0, 0, 1, 1], [], []>} : vector<8x36xf32>, vector<36x256xf32>, vector<8x256xf32> -> vector<8x256xf32>
    %c0_11 = arith.constant 0 : index
    %c0_12 = arith.constant 0 : index
    %28 = vector.load %arg7[%c0_11, %c0_12] : memref<8x1xf32, #tpu.memory_space<vmem>>, vector<8x1xf32>
    %cst_13 = arith.constant dense<0.000000e+00> : vector<8xf32>
    %29 = vector.multi_reduction <add>, %27, %cst_13 [1] : vector<8x256xf32> to vector<8xf32>
    %30 = vector.shape_cast %29 : vector<8xf32> to vector<8x1xf32>
    %31 = arith.addf %28, %30 : vector<8x1xf32>
    %c0_14 = arith.constant 0 : index
    %c0_15 = arith.constant 0 : index
    %32 = vector.load %arg7[%c0_14, %c0_15] : memref<8x1xf32, #tpu.memory_space<vmem>>, vector<8x1xf32>
    tpu.vector_store %arg7[%c0_14, %c0_15], %31 {strides = array<i32>} : memref<8x1xf32, #tpu.memory_space<vmem>>, vector<8x1xf32>,
    %c0_16 = arith.constant 0 : index
    %c0_17 = arith.constant 0 : index
    %33 = vector.load %arg8[%c0_16, %c0_17] : memref<8x1xf32, #tpu.memory_space<vmem>>, vector<8x1xf32>
    %34 = arith.mulf %27, %27 : vector<8x256xf32>
    %cst_18 = arith.constant dense<0.000000e+00> : vector<8xf32>
    %35 = vector.multi_reduction <add>, %34, %cst_18 [1] : vector<8x256xf32> to vector<8xf32>
    %36 = vector.shape_cast %35 : vector<8xf32> to vector<8x1xf32>
    %37 = arith.addf %33, %36 : vector<8x1xf32>
    %c0_19 = arith.constant 0 : index
    %c0_20 = arith.constant 0 : index
    %38 = vector.load %arg8[%c0_19, %c0_20] : memref<8x1xf32, #tpu.memory_space<vmem>>, vector<8x1xf32>
    tpu.vector_store %arg8[%c0_19, %c0_20], %37 {strides = array<i32>} : memref<8x1xf32, #tpu.memory_space<vmem>>, vector<8x1xf32>,
    %39 = arith.index_cast %arg0 : i32 to index
    %c0_21 = arith.constant 0 : index
    %c0_22 = arith.constant 0 : index
    %40 = vector.load %arg5[%39, %c0_21, %c0_22] : memref<2x8x256xf32, #tpu.memory_space<vmem>>, vector<1x8x256xf32>
    %41 = vector.shape_cast %40 : vector<1x8x256xf32> to vector<8x256xf32>
    %42 = vector.shape_cast %27 : vector<8x256xf32> to vector<1x8x256xf32>
    tpu.vector_store %arg5[%39, %c0_21, %c0_22], %42 {strides = array<i32>} : memref<2x8x256xf32, #tpu.memory_space<vmem>>, vector<1x8x256xf32>,
    %c1_i32 = arith.constant 1 : i32
    %43 = arith.cmpi eq, %arg0, %c1_i32 : i32
    %44 = arith.extui %43 : i1 to i32
    %c0_i32_23 = arith.constant 0 : i32
    %45 = arith.cmpi ne, %44, %c0_i32_23 : i32
    scf.if %45 {
      %c0_24 = arith.constant 0 : index
      %c0_25 = arith.constant 0 : index
      %46 = vector.load %arg7[%c0_24, %c0_25] : memref<8x1xf32, #tpu.memory_space<vmem>>, vector<8x1xf32>
      %cst_26 = arith.constant 5.120000e+02 : f32
      %47 = vector.broadcast %cst_26 : f32 to vector<8x1xf32>
      %48 = arith.divf %46, %47 : vector<8x1xf32>
      %c0_27 = arith.constant 0 : index
      %c0_28 = arith.constant 0 : index
      %49 = vector.load %arg8[%c0_27, %c0_28] : memref<8x1xf32, #tpu.memory_space<vmem>>, vector<8x1xf32>
      %cst_29 = arith.constant 5.120000e+02 : f32
      %50 = vector.broadcast %cst_29 : f32 to vector<8x1xf32>
      %51 = arith.divf %49, %50 : vector<8x1xf32>
      %52 = arith.mulf %48, %48 : vector<8x1xf32>
      %53 = arith.subf %51, %52 : vector<8x1xf32>
      %cst_30 = arith.constant 0.000000e+00 : f32
      %54 = vector.broadcast %cst_30 : f32 to vector<8x1xf32>
      %55 = arith.maximumf %53, %54 : vector<8x1xf32>
      %cst_31 = arith.constant 9.99999974E-6 : f32
      %56 = vector.broadcast %cst_31 : f32 to vector<8x1xf32>
      %57 = arith.addf %55, %56 : vector<8x1xf32>
      %58 = math.rsqrt %57 : vector<8x1xf32>
      %c0_32 = arith.constant 0 : index
      %c0_33 = arith.constant 0 : index
      %59 = vector.load %arg3[%c0_32, %c0_33] : memref<8x1xf32, #tpu.memory_space<vmem>>, vector<8x1xf32>
      %60 = arith.mulf %59, %58 : vector<8x1xf32>
      %61 = vector.shape_cast %60 : vector<8x1xf32> to vector<1x8x1xf32>
      %c0_34 = arith.constant 0 : index
      %c0_35 = arith.constant 0 : index
      %62 = vector.load %arg4[%c0_34, %c0_35] : memref<8x1xf32, #tpu.memory_space<vmem>>, vector<8x1xf32>
      %63 = arith.mulf %48, %59 : vector<8x1xf32>
      %64 = arith.mulf %63, %58 : vector<8x1xf32>
      %65 = arith.subf %62, %64 : vector<8x1xf32>
      %66 = vector.shape_cast %65 : vector<8x1xf32> to vector<1x8x1xf32>
      %c0_36 = arith.constant 0 : index
      %c0_37 = arith.constant 0 : index
      %c0_38 = arith.constant 0 : index
      %67 = vector.load %arg5[%c0_36, %c0_37, %c0_38] : memref<2x8x256xf32, #tpu.memory_space<vmem>>, vector<2x8x256xf32>
      %68 = vector.broadcast %61 : vector<1x8x1xf32> to vector<2x8x256xf32>
      %69 = arith.mulf %67, %68 : vector<2x8x256xf32>
      %70 = vector.broadcast %66 : vector<1x8x1xf32> to vector<2x8x256xf32>
      %71 = arith.addf %69, %70 : vector<2x8x256xf32>
      %cst_39 = arith.constant 0.000000e+00 : f32
      %72 = vector.broadcast %cst_39 : f32 to vector<2x8x256xf32>
      %73 = arith.maximumf %71, %72 : vector<2x8x256xf32>
      %c0_40 = arith.constant 0 : index
      %c0_41 = arith.constant 0 : index
      %c0_42 = arith.constant 0 : index
      %74 = vector.load %arg5[%c0_40, %c0_41, %c0_42] : memref<2x8x256xf32, #tpu.memory_space<vmem>>, vector<2x8x256xf32>
      tpu.vector_store %arg5[%c0_40, %c0_41, %c0_42], %73 {strides = array<i32>} : memref<2x8x256xf32, #tpu.memory_space<vmem>>, vector<2x8x256xf32>,
    } else {
    }
    return
  }
  func.func @transform_0(%arg0: i32) -> (i32, i32, i32, i32) {
    %c0_i32 = arith.constant 0 : i32
    %c0_i32_0 = arith.constant 0 : i32
    %c0_i32_1 = arith.constant 0 : i32
    %c0_i32_2 = arith.constant 0 : i32
    return %arg0, %c0_i32, %c0_i32_0, %c0_i32_1 : i32, i32, i32, i32
  }
  func.func @transform_1(%arg0: i32) -> (i32, i32) {
    %c0_i32 = arith.constant 0 : i32
    %c0_i32_0 = arith.constant 0 : i32
    %c0_i32_1 = arith.constant 0 : i32
    return %c0_i32, %c0_i32_0 : i32, i32
  }
  func.func @transform_2(%arg0: i32) -> (i32, i32) {
    %c0_i32 = arith.constant 0 : i32
    %c0_i32_0 = arith.constant 0 : i32
    %c0_i32_1 = arith.constant 0 : i32
    return %c0_i32, %c0_i32_0 : i32, i32
  }
  func.func @transform_3(%arg0: i32) -> (i32, i32) {
    %c0_i32 = arith.constant 0 : i32
    %c0_i32_0 = arith.constant 0 : i32
    %c0_i32_1 = arith.constant 0 : i32
    return %c0_i32, %c0_i32_0 : i32, i32
  }
  func.func @transform_4(%arg0: i32) -> (i32, i32, i32) {
    %c0_i32 = arith.constant 0 : i32
    %c0_i32_0 = arith.constant 0 : i32
    %c0_i32_1 = arith.constant 0 : i32
    %c0_i32_2 = arith.constant 0 : i32
    return %c0_i32, %c0_i32_0, %c0_i32_1 : i32, i32, i32
  }
}

</mosaic_0001>

<llo_original>
// kernel: conv_block22_forward.1
$region0: #{conv_block22_forward.1}
  #allocation0 [shape = 'u32[]', space=smem, size = 0x4, offset = 0x4, fixed_abs, tag = 'smem constant byte address 0x4 - core index']
  #allocation1 [shape = 'u32[144,128]{1,0:T(1,128)}', space=vmem, size = 0x12000, scoped, tag = 'internal scratch']
  #allocation2 [shape = 'f32[4,18,18]{2,1,0:T(8,128)}', space=vmem, size = 0xc000, scoped, tag = 'scratch operand']
  #allocation3 [shape = 'f32[8,1]{1,0:T(8,128)}', space=vmem, size = 0x1000, scoped, tag = 'scratch operand']
  #allocation4 [shape = 'f32[8,1]{1,0:T(8,128)}', space=vmem, size = 0x1000, scoped, tag = 'scratch operand']
  %s0 = inlined_call_operand.vmem [shape: f32[2,4,16,16], index: 0, kind: input, shape index: {}]
  %s1 = inlined_call_operand.vmem [shape: f32[8,36], index: 1, kind: input, shape index: {}]
  %s2 = inlined_call_operand.vmem [shape: f32[8,1], index: 2, kind: input, shape index: {}]
  %s3 = inlined_call_operand.vmem [shape: f32[8,1], index: 3, kind: input, shape index: {}]
  %s4 = inlined_call_operand.vmem [shape: f32[2,8,256], index: 4, kind: output, shape index: {}]
  %s5 = sld [smem:[#allocation0]]
  $region57: #{conv_block22_forward.1} parent=0
    _
  %s7 = ssub.s32 1, %s5
  %s8 = scalar_select 0, %s7, %s5
  loop: start=0, step=1, limit=4
  $region2: #{conv_block22_forward.1} parent=0 // loop_pre_header
    _
  $region3: #{conv_block22_forward.1} parent=0 // loop_header
    %s10 = sphi 0, %s14
    %p11 = scmp.ge.s32.totalorder %s10, 4
    %s20 = sphi 0, %s22
    %s23 = sphi 0, %s20
    %s24 = sphi 0, %s23
    %s40 = sphi 0, %s24
    %s44 = sphi 0, %s44
    %s46 = sphi 0, %s44
    %s47 = sphi 0, %s46
    %s61 = sphi 0, %s47
    %s65 = sphi 0, %s65
    %s67 = sphi 0, %s65
    %s68 = sphi 0, %s67
    %s82 = sphi 0, %s68
    %s86 = sphi 0, %s86
    %s88 = sphi 0, %s86
    %s89 = sphi 0, %s88
    %s103 = sphi 0, %s89
    %s107 = sphi 0, %s107
    %s109 = sphi 0, %s107
    %s110 = sphi 0, %s109
    %s124 = sphi 0, %s110
  $region4: #{conv_block22_forward.1} parent=0 // loop_header_branch
    %13 = sbr.rel (%p11) target = $region8
  $region5: #{conv_block22_forward.1} parent=0 // loop_body
    %s15 = ssub.s32 %s10, 1
    %s16 = ssub.s32 %s10, 2
    %s17 = sadd.s32 %s10, 1
    %s18 = ssub.s32 %s10, %s17
    %p19 = scmp.eq.s32.totalorder %s18, 0
    %s21 = sadd.s32 %s20, 1
    %s22 = scalar_select %p19, %s20, %s21
    %p25 = pneg %p19
    %p26 = scmp.eq.s32.totalorder %s10, 1
    %p27 = por %p25, %p26
    %p28 = scmp.ne.s32.totalorder %s20, %s23
    %p29 = scmp.eq.s32.totalorder %s10, 0
    %p30 = por %p28, %p29
    %p31 = scmp.ne.s32.totalorder %s20, %s23
    %p32 = scmp.eq.s32.totalorder %s15, 1
    %p33 = por %p31, %p32
    %p34 = scmp.ne.s32.totalorder %s23, %s24
    %p35 = scmp.eq.s32.totalorder %s15, 0
    %p36 = por %p34, %p35
    %p37 = scmp.ne.s32.totalorder %s23, %s24
    %p38 = scmp.eq.s32.totalorder %s16, 1
    %p39 = por %p37, %p38
    %p41 = scmp.ne.s32.totalorder %s24, %s40
    %p42 = scmp.eq.s32.totalorder %s16, 0
    %p43 = por %p41, %p42
    %s45 = sadd.s32 %s44, 1
    %p48 = scmp.eq.s32.totalorder %s10, 1
    %p49 = scmp.ne.s32.totalorder %s44, %s46
    %p50 = scmp.eq.s32.totalorder %s10, 0
    %p51 = por %p49, %p50
    %p52 = scmp.ne.s32.totalorder %s44, %s46
    %p53 = scmp.eq.s32.totalorder %s15, 1
    %p54 = por %p52, %p53
    %p55 = scmp.ne.s32.totalorder %s46, %s47
    %p56 = scmp.eq.s32.totalorder %s15, 0
    %p57 = por %p55, %p56
    %p58 = scmp.ne.s32.totalorder %s46, %s47
    %p59 = scmp.eq.s32.totalorder %s16, 1
    %p60 = por %p58, %p59
    %p62 = scmp.ne.s32.totalorder %s47, %s61
    %p63 = scmp.eq.s32.totalorder %s16, 0
    %p64 = por %p62, %p63
    %s66 = sadd.s32 %s65, 1
    %p69 = scmp.eq.s32.totalorder %s10, 1
    %p70 = scmp.ne.s32.totalorder %s65, %s67
    %p71 = scmp.eq.s32.totalorder %s10, 0
    %p72 = por %p70, %p71
    %p73 = scmp.ne.s32.totalorder %s65, %s67
    %p74 = scmp.eq.s32.totalorder %s15, 1
    %p75 = por %p73, %p74
    %p76 = scmp.ne.s32.totalorder %s67, %s68
    %p77 = scmp.eq.s32.totalorder %s15, 0
    %p78 = por %p76, %p77
    %p79 = scmp.ne.s32.totalorder %s67, %s68
    %p80 = scmp.eq.s32.totalorder %s16, 1
    %p81 = por %p79, %p80
    %p83 = scmp.ne.s32.totalorder %s68, %s82
    %p84 = scmp.eq.s32.totalorder %s16, 0
    %p85 = por %p83, %p84
    %s87 = sadd.s32 %s86, 1
    %p90 = scmp.eq.s32.totalorder %s10, 1
    %p91 = scmp.ne.s32.totalorder %s86, %s88
    %p92 = scmp.eq.s32.totalorder %s10, 0
    %p93 = por %p91, %p92
    %p94 = scmp.ne.s32.totalorder %s86, %s88
    %p95 = scmp.eq.s32.totalorder %s15, 1
    %p96 = por %p94, %p95
    %p97 = scmp.ne.s32.totalorder %s88, %s89
    %p98 = scmp.eq.s32.totalorder %s15, 0
    %p99 = por %p97, %p98
    %p100 = scmp.ne.s32.totalorder %s88, %s89
    %p101 = scmp.eq.s32.totalorder %s16, 1
    %p102 = por %p100, %p101
    %p104 = scmp.ne.s32.totalorder %s89, %s103
    %p105 = scmp.eq.s32.totalorder %s16, 0
    %p106 = por %p104, %p105
    %s108 = sadd.s32 %s107, 1
    %p111 = scmp.eq.s32.totalorder %s10, 1
    %p112 = scmp.ne.s32.totalorder %s107, %s109
    %p113 = scmp.eq.s32.totalorder %s10, 0
    %p114 = por %p112, %p113
    %p115 = scmp.ne.s32.totalorder %s107, %s109
    %p116 = scmp.eq.s32.totalorder %s15, 1
    %p117 = por %p115, %p116
    %p118 = scmp.ne.s32.totalorder %s109, %s110
    %p119 = scmp.eq.s32.totalorder %s15, 0
    %p120 = por %p118, %p119
    %p121 = scmp.ne.s32.totalorder %s109, %s110
    %p122 = scmp.eq.s32.totalorder %s16, 1
    %p123 = por %p121, %p122
    %p125 = scmp.ne.s32.totalorder %s110, %s124
    %p126 = scmp.eq.s32.totalorder %s16, 0
    %p127 = por %p125, %p126
    %p128 = scmp.le.s32.totalorder 1, %s10
    %p129 = scmp.lt.s32.totalorder %s10, 3
    %p130 = pnand %p128, %p129
    %p131 = pneg %p130
    // Predicated region
    $region9: #{conv_block22_forward.1} parent=5 // pred_check
      _
    $region10: #{conv_block22_forward.1} parent=5 // pred_check_branch
      %133 = sbr.rel (%p130) target = $region12
    $region11: #{conv_block22_forward.1} parent=5 // pred_region
      %s134 = ssub.s32 %s10, 1
      // Predicated region
      $region13: #{conv_block22_forward.1} parent=11 // pred_check
        %p135 = pneg %p57
      $region14: #{conv_block22_forward.1} parent=11 // pred_check_branch
        %137 = sbr.rel (%p135) target = $region16
      $region15: #{conv_block22_forward.1} parent=11 // pred_region
        _
      $region16: #{conv_block22_forward.1} parent=11 // pred_fallthru
        _
      // Predicated region
      $region17: #{conv_block22_forward.1} parent=11 // pred_check
        %p138 = pneg %p78
      $region18: #{conv_block22_forward.1} parent=11 // pred_check_branch
        %140 = sbr.rel (%p138) target = $region20
      $region19: #{conv_block22_forward.1} parent=11 // pred_region
        _
      $region20: #{conv_block22_forward.1} parent=11 // pred_fallthru
        _
      // Predicated region
      $region21: #{conv_block22_forward.1} parent=11 // pred_check
        %p141 = pneg %p99
      $region22: #{conv_block22_forward.1} parent=11 // pred_check_branch
        %143 = sbr.rel (%p141) target = $region24
      $region23: #{conv_block22_forward.1} parent=11 // pred_region
        _
      $region24: #{conv_block22_forward.1} parent=11 // pred_fallthru
        _
    $region12: #{conv_block22_forward.1} parent=5 // pred_fallthru
      _
    %p144 = scmp.lt.s32.totalorder %s10, 2
    // Predicated region
    $region25: #{conv_block22_forward.1} parent=5 // pred_check
      %p145 = pneg %p144
    $region26: #{conv_block22_forward.1} parent=5 // pred_check_branch
      %147 = sbr.rel (%p145) target = $region28
    $region27: #{conv_block22_forward.1} parent=5 // pred_region
      // Predicated region
      $region29: #{conv_block22_forward.1} parent=27 // pred_check
        %p148 = pneg %p30
      $region30: #{conv_block22_forward.1} parent=27 // pred_check_branch
        %150 = sbr.rel (%p148) target = $region32
      $region31: #{conv_block22_forward.1} parent=27 // pred_region
        %p151 = scmp.lt.s32.totalorder %s10, 1
        %s152 = scalar_select %p151, %s10, 1
        %s153 = smul.addr %s152, 8
        %s154 = smul.addr %s153, 8
        %s155 = scalar_lea.vmem %s0, %s154
      $region32: #{conv_block22_forward.1} parent=27 // pred_fallthru
        _
    $region28: #{conv_block22_forward.1} parent=5 // pred_fallthru
      _
    %p156 = scmp.le.s32.totalorder 1, %s10
    %p157 = scmp.lt.s32.totalorder %s10, 3
    %p158 = pnand %p156, %p157
    %p159 = pneg %p158
    // Predicated region
    $region33: #{conv_block22_forward.1} parent=5 // pred_check
      _
    $region34: #{conv_block22_forward.1} parent=5 // pred_check_branch
      %161 = sbr.rel (%p158) target = $region36
    $region35: #{conv_block22_forward.1} parent=5 // pred_region
      %s162 = ssub.s32 %s10, 1
      %p163 = scmp.lt.s32.totalorder %s15, 1
      %s164 = scalar_select %p163, %s15, 1
      %s165 = smul.addr %s164, 8
      %s166 = smul.addr %s165, 8
      %s167 = scalar_lea.vmem %s0, %s166
      %p168 = pneg %p36
      %p169 = pneg %p33
      %p170 = pneg %p57
      %p171 = pneg %p54
      %p172 = pneg %p78
      %p173 = pneg %p75
      %p174 = pneg %p99
      %p175 = pneg %p96
      %p176 = pneg %p120
      %p177 = pneg %p117
      %p178 = scmp.lt.s32.totalorder %s15, 1
      %s179 = scalar_select %p178, %s15, 1
      %s180 = smul.addr %s179, 8
      %s181 = smul.addr %s180, 8
      %s182 = scalar_lea.vmem %s0, %s181
      %p183 = scmp.eq.s32.totalorder %s15, 0
      // Predicated region
      $region37: #{conv_block22_forward.1} parent=35 // pred_check
        %p184 = pneg %p183
      $region38: #{conv_block22_forward.1} parent=35 // pred_check_branch
        %186 = sbr.rel (%p184) target = $region40
      $region39: #{conv_block22_forward.1} parent=35 // pred_region
        %vm187 = vcmask 146432
        %188 = vst.msk [vmem:[#allocation2] sm:$0xff] %vm187, 0.0
        %189 = vst.msk [vmem:[#allocation2 + $0x8] sm:$0xff] %vm187, 0.0
        %vm190 = vcmask 140288
        %191 = vst.msk [vmem:[#allocation2 + $0x10] sm:$0x3] %vm190, 0.0
        %192 = vst.msk [vmem:[#allocation2 + $0x18] sm:$0xff] %vm187, 0.0
        %193 = vst.msk [vmem:[#allocation2 + $0x20] sm:$0xff] %vm187, 0.0
        %194 = vst.msk [vmem:[#allocation2 + $0x28] sm:$0x3] %vm190, 0.0
        %195 = vst.msk [vmem:[#allocation2 + $0x30] sm:$0xff] %vm187, 0.0
        %196 = vst.msk [vmem:[#allocation2 + $0x38] sm:$0xff] %vm187, 0.0
        %197 = vst.msk [vmem:[#allocation2 + $0x40] sm:$0x3] %vm190, 0.0
        %198 = vst.msk [vmem:[#allocation2 + $0x48] sm:$0xff] %vm187, 0.0
        %199 = vst.msk [vmem:[#allocation2 + $0x50] sm:$0xff] %vm187, 0.0
        %200 = vst.msk [vmem:[#allocation2 + $0x58] sm:$0x3] %vm190, 0.0
        %vm201 = vcmask 7168
        %202 = vst.msk [vmem:[#allocation3] sm:$0xff] %vm201, 0.0
        %203 = vst.msk [vmem:[#allocation4] sm:$0xff] %vm201, 0.0
      $region40: #{conv_block22_forward.1} parent=35 // pred_fallthru
        _
      %v204 = vld [vmem:[%s182] sm:$0xff]
      %v205 = vld [vmem:[%s182 + $0x8] sm:$0xff]
      %v206 = vld [vmem:[%s182 + $0x10] sm:$0xff]
      %v207 = vld [vmem:[%s182 + $0x18] sm:$0xff]
      %v208 = vld [vmem:[%s182 + $0x20] sm:$0xff]
      %v209 = vld [vmem:[%s182 + $0x28] sm:$0xff]
      %v210 = vld [vmem:[%s182 + $0x30] sm:$0xff]
      %v211 = vld [vmem:[%s182 + $0x38] sm:$0xff]
      %220 = vrot.lane.b32.xlu0 %v204, 1
      %v221 = vpop.permute.xlu0 %220
      %222 = vrot.lane.b32.xlu0 %v205, 1
      %v223 = vpop.permute.xlu0 %222
      %224 = vrot.lane.b32.xlu0 %v206, 1
      %v225 = vpop.permute.xlu0 %224
      %226 = vrot.lane.b32.xlu0 %v207, 1
      %v227 = vpop.permute.xlu0 %226
      %228 = vrot.lane.b32.xlu0 %v208, 1
      %v229 = vpop.permute.xlu0 %228
      %230 = vrot.lane.b32.xlu0 %v209, 1
      %v231 = vpop.permute.xlu0 %230
      %232 = vrot.lane.b32.xlu0 %v210, 1
      %v233 = vpop.permute.xlu0 %232
      %234 = vrot.lane.b32.xlu0 %v211, 1
      %v235 = vpop.permute.xlu0 %234
      %vm244 = vcmask 138248
      %245 = vst.msk [vmem:[#allocation2 + $0x1] sm:$0xff] %vm244, %v221
      %246 = vst.msk [vmem:[#allocation2 + $0x9] sm:$0xff] %vm244, %v223
      %247 = vst.msk [vmem:[#allocation2 + $0x19] sm:$0xff] %vm244, %v225
      %248 = vst.msk [vmem:[#allocation2 + $0x21] sm:$0xff] %vm244, %v227
      %249 = vst.msk [vmem:[#allocation2 + $0x31] sm:$0xff] %vm244, %v229
      %250 = vst.msk [vmem:[#allocation2 + $0x39] sm:$0xff] %vm244, %v231
      %251 = vst.msk [vmem:[#allocation2 + $0x49] sm:$0xff] %vm244, %v233
      %252 = vst.msk [vmem:[#allocation2 + $0x51] sm:$0xff] %vm244, %v235
      %v253 = vld [vmem:[#allocation2] sm:$0xff]
      %v254 = vld [vmem:[#allocation2 + $0x8] sm:$0xff]
      %v255 = vld [vmem:[#allocation2 + $0x10] sm:$0x3]
      %v256 = vld [vmem:[#allocation2 + $0x18] sm:$0xff]
      %v257 = vld [vmem:[#allocation2 + $0x20] sm:$0xff]
      %v258 = vld [vmem:[#allocation2 + $0x28] sm:$0x3]
      %v259 = vld [vmem:[#allocation2 + $0x30] sm:$0xff]
      %v260 = vld [vmem:[#allocation2 + $0x38] sm:$0xff]
      %v261 = vld [vmem:[#allocation2 + $0x40] sm:$0x3]
      %v262 = vld [vmem:[#allocation2 + $0x48] sm:$0xff]
      %v263 = vld [vmem:[#allocation2 + $0x50] sm:$0xff]
      %v264 = vld [vmem:[#allocation2 + $0x58] sm:$0x3]
      %v265 = vcombine.low %v253, %v259
      %v266 = vcombine.high %v253, %v259
      %v268 = vunpack.c.l.s4 1983009808
      %v269 = vunpack.c.0.s8 %v268
      %v270 = vlaneseq
      %v271 = vshrl.u32 %v270, 7
      %v272 = vsub.s32 %v269, %v271
      %v273 = vrot.slane %v265, %v272
      %v275 = vunpack.c.l.s4 1983009808
      %v276 = vunpack.c.0.s8 %v275
      %v277 = vlaneseq
      %v278 = vshrl.u32 %v277, 7
      %v279 = vsub.s32 %v276, %v278
      %v280 = vrot.slane %v266, %v279
      %v281 = vcombine.low %v256, %v262
      %v282 = vcombine.high %v256, %v262
      %v284 = vunpack.c.l.s4 1983009808
      %v285 = vunpack.c.0.s8 %v284
      %v286 = vlaneseq
      %v287 = vshrl.u32 %v286, 7
      %v288 = vsub.s32 %v285, %v287
      %v289 = vrot.slane %v281, %v288
      %v291 = vunpack.c.l.s4 1983009808
      %v292 = vunpack.c.0.s8 %v291
      %v293 = vlaneseq
      %v294 = vshrl.u32 %v293, 7
      %v295 = vsub.s32 %v292, %v294
      %v296 = vrot.slane %v282, %v295
      %v297 = vcombine.low %v273, %v289
      %v298 = vcombine.high %v273, %v289
      %v300 = vunpack.c.l.s4 1934713408
      %v301 = vunpack.c.0.s8 %v300
      %v302 = vlaneseq
      %v303 = vshrl.u32 %v302, 7
      %v304 = vsub.s32 %v301, %v303
      %v305 = vrot.slane %v297, %v304
      %v307 = vunpack.c.l.s4 1934713408
      %v308 = vunpack.c.0.s8 %v307
      %v309 = vlaneseq
      %v310 = vshrl.u32 %v309, 7
      %v311 = vsub.s32 %v308, %v310
      %v312 = vrot.slane %v298, %v311
      %v313 = vcombine.low %v280, %v296
      %v314 = vcombine.high %v280, %v296
      %v316 = vunpack.c.l.s4 1934713408
      %v317 = vunpack.c.0.s8 %v316
      %v318 = vlaneseq
      %v319 = vshrl.u32 %v318, 7
      %v320 = vsub.s32 %v317, %v319
      %v321 = vrot.slane %v313, %v320
      %v323 = vunpack.c.l.s4 1934713408
      %v324 = vunpack.c.0.s8 %v323
      %v325 = vlaneseq
      %v326 = vshrl.u32 %v325, 7
      %v327 = vsub.s32 %v324, %v326
      %v328 = vrot.slane %v314, %v327
      %v329 = vcombine.high %v305, 0.0
      %v330 = vcombine.high %v312, 0.0
      %v331 = vcombine.high %v321, 0.0
      %v332 = vcombine.high %v328, 0.0
      %v333 = vcombine.low %v254, %v260
      %v334 = vcombine.high %v254, %v260
      %v336 = vunpack.c.l.s4 1983009808
      %v337 = vunpack.c.0.s8 %v336
      %v338 = vlaneseq
      %v339 = vshrl.u32 %v338, 7
      %v340 = vsub.s32 %v337, %v339
      %v341 = vrot.slane %v333, %v340
      %v343 = vunpack.c.l.s4 1983009808
      %v344 = vunpack.c.0.s8 %v343
      %v345 = vlaneseq
      %v346 = vshrl.u32 %v345, 7
      %v347 = vsub.s32 %v344, %v346
      %v348 = vrot.slane %v334, %v347
      %v349 = vcombine.low %v257, %v263
      %v350 = vcombine.high %v257, %v263
      %v352 = vunpack.c.l.s4 1983009808
      %v353 = vunpack.c.0.s8 %v352
      %v354 = vlaneseq
      %v355 = vshrl.u32 %v354, 7
      %v356 = vsub.s32 %v353, %v355
      %v357 = vrot.slane %v349, %v356
      %v359 = vunpack.c.l.s4 1983009808
      %v360 = vunpack.c.0.s8 %v359
      %v361 = vlaneseq
      %v362 = vshrl.u32 %v361, 7
      %v363 = vsub.s32 %v360, %v362
      %v364 = vrot.slane %v350, %v363
      %v365 = vcombine.low %v341, %v357
      %v366 = vcombine.high %v341, %v357
      %v368 = vunpack.c.l.s4 1934713408
      %v369 = vunpack.c.0.s8 %v368
      %v370 = vlaneseq
      %v371 = vshrl.u32 %v370, 7
      %v372 = vsub.s32 %v369, %v371
      %v373 = vrot.slane %v365, %v372
      %v375 = vunpack.c.l.s4 1934713408
      %v376 = vunpack.c.0.s8 %v375
      %v377 = vlaneseq
      %v378 = vshrl.u32 %v377, 7
      %v379 = vsub.s32 %v376, %v378
      %v380 = vrot.slane %v366, %v379
      %v381 = vcombine.low %v348, %v364
      %v382 = vcombine.high %v348, %v364
      %v384 = vunpack.c.l.s4 1934713408
      %v385 = vunpack.c.0.s8 %v384
      %v386 = vlaneseq
      %v387 = vshrl.u32 %v386, 7
      %v388 = vsub.s32 %v385, %v387
      %v389 = vrot.slane %v381, %v388
      %v391 = vunpack.c.l.s4 1934713408
      %v392 = vunpack.c.0.s8 %v391
      %v393 = vlaneseq
      %v394 = vshrl.u32 %v393, 7
      %v395 = vsub.s32 %v392, %v394
      %v396 = vrot.slane %v382, %v395
      %v397 = vcombine.high %v373, 0.0
      %v398 = vcombine.high %v380, 0.0
      %v399 = vcombine.high %v389, 0.0
      %v400 = vcombine.high %v396, 0.0
      %402 = vrot.lane.b32.xlu0 %v329, 16
      %v403 = vpop.permute.xlu0 %402
      %406 = vrot.lane.b32.xlu0 %v312, 32
      %v407 = vpop.permute.xlu0 %406
      %410 = vrot.lane.b32.xlu0 %v330, 48
      %v411 = vpop.permute.xlu0 %410
      %414 = vrot.lane.b32.xlu0 %v321, 64
      %v415 = vpop.permute.xlu0 %414
      %418 = vrot.lane.b32.xlu0 %v331, 80
      %v419 = vpop.permute.xlu0 %418
      %422 = vrot.lane.b32.xlu0 %v328, 96
      %v423 = vpop.permute.xlu0 %422
      %426 = vrot.lane.b32.xlu0 %v332, 112
      %v427 = vpop.permute.xlu0 %426
      %430 = vrot.lane.b32.xlu0 %v397, 16
      %v431 = vpop.permute.xlu0 %430
      %434 = vrot.lane.b32.xlu0 %v380, 32
      %v435 = vpop.permute.xlu0 %434
      %438 = vrot.lane.b32.xlu0 %v398, 48
      %v439 = vpop.permute.xlu0 %438
      %442 = vrot.lane.b32.xlu0 %v389, 64
      %v443 = vpop.permute.xlu0 %442
      %446 = vrot.lane.b32.xlu0 %v399, 80
      %v447 = vpop.permute.xlu0 %446
      %450 = vrot.lane.b32.xlu0 %v396, 96
      %v451 = vpop.permute.xlu0 %450
      %454 = vrot.lane.b32.xlu0 %v400, 112
      %v455 = vpop.permute.xlu0 %454
      %vm457 = vcmask 130048
      %v458 = vsel %vm457, %v305, %v403
      %vm459 = vcmask 261120
      %v460 = vsel %vm459, %v458, %v407
      %vm461 = vcmask 392192
      %v462 = vsel %vm461, %v460, %v411
      %vm463 = vcmask 523264
      %v464 = vsel %vm463, %v462, %v415
      %vm465 = vcmask 654336
      %v466 = vsel %vm465, %v464, %v419
      %vm467 = vcmask 785408
      %v468 = vsel %vm467, %v466, %v423
      %vm469 = vcmask 916480
      %v470 = vsel %vm469, %v468, %v427
      %v471 = vsel %vm457, %v373, %v431
      %v472 = vsel %vm459, %v471, %v435
      %v473 = vsel %vm461, %v472, %v439
      %v474 = vsel %vm463, %v473, %v443
      %v475 = vsel %vm465, %v474, %v447
      %v476 = vsel %vm467, %v475, %v451
      %v477 = vsel %vm469, %v476, %v455
      %486 = vrot.lane.b32.xlu0 %v253, 127
      %v487 = vpop.permute.xlu0 %486
      %488 = vrot.lane.b32.xlu0 %v254, 127
      %v489 = vpop.permute.xlu0 %488
      %490 = vrot.lane.b32.xlu0 %v256, 127
      %v491 = vpop.permute.xlu0 %490
      %492 = vrot.lane.b32.xlu0 %v257, 127
      %v493 = vpop.permute.xlu0 %492
      %494 = vrot.lane.b32.xlu0 %v259, 127
      %v495 = vpop.permute.xlu0 %494
      %496 = vrot.lane.b32.xlu0 %v260, 127
      %v497 = vpop.permute.xlu0 %496
      %498 = vrot.lane.b32.xlu0 %v262, 127
      %v499 = vpop.permute.xlu0 %498
      %500 = vrot.lane.b32.xlu0 %v263, 127
      %v501 = vpop.permute.xlu0 %500
      %v510 = vcombine.low %v487, %v495
      %v511 = vcombine.high %v487, %v495
      %v513 = vunpack.c.l.s4 1983009808
      %v514 = vunpack.c.0.s8 %v513
      %v515 = vlaneseq
      %v516 = vshrl.u32 %v515, 7
      %v517 = vsub.s32 %v514, %v516
      %v518 = vrot.slane %v510, %v517
      %v520 = vunpack.c.l.s4 1983009808
      %v521 = vunpack.c.0.s8 %v520
      %v522 = vlaneseq
      %v523 = vshrl.u32 %v522, 7
      %v524 = vsub.s32 %v521, %v523
      %v525 = vrot.slane %v511, %v524
      %v526 = vcombine.low %v491, %v499
      %v527 = vcombine.high %v491, %v499
      %v529 = vunpack.c.l.s4 1983009808
      %v530 = vunpack.c.0.s8 %v529
      %v531 = vlaneseq
      %v532 = vshrl.u32 %v531, 7
      %v533 = vsub.s32 %v530, %v532
      %v534 = vrot.slane %v526, %v533
      %v536 = vunpack.c.l.s4 1983009808
      %v537 = vunpack.c.0.s8 %v536
      %v538 = vlaneseq
      %v539 = vshrl.u32 %v538, 7
      %v540 = vsub.s32 %v537, %v539
      %v541 = vrot.slane %v527, %v540
      %v542 = vcombine.low %v518, %v534
      %v543 = vcombine.high %v518, %v534
      %v545 = vunpack.c.l.s4 1934713408
      %v546 = vunpack.c.0.s8 %v545
      %v547 = vlaneseq
      %v548 = vshrl.u32 %v547, 7
      %v549 = vsub.s32 %v546, %v548
      %v550 = vrot.slane %v542, %v549
      %v552 = vunpack.c.l.s4 1934713408
      %v553 = vunpack.c.0.s8 %v552
      %v554 = vlaneseq
      %v555 = vshrl.u32 %v554, 7
      %v556 = vsub.s32 %v553, %v555
      %v557 = vrot.slane %v543, %v556
      %v558 = vcombine.low %v525, %v541
      %v559 = vcombine.high %v525, %v541
      %v561 = vunpack.c.l.s4 1934713408
      %v562 = vunpack.c.0.s8 %v561
      %v563 = vlaneseq
      %v564 = vshrl.u32 %v563, 7
      %v565 = vsub.s32 %v562, %v564
      %v566 = vrot.slane %v558, %v565
      %v568 = vunpack.c.l.s4 1934713408
      %v569 = vunpack.c.0.s8 %v568
      %v570 = vlaneseq
      %v571 = vshrl.u32 %v570, 7
      %v572 = vsub.s32 %v569, %v571
      %v573 = vrot.slane %v559, %v572
      %v574 = vcombine.high %v550, 0.0
      %v575 = vcombine.high %v557, 0.0
      %v576 = vcombine.high %v566, 0.0
      %v577 = vcombine.high %v573, 0.0
      %v578 = vcombine.low %v489, %v497
      %v579 = vcombine.high %v489, %v497
      %v581 = vunpack.c.l.s4 1983009808
      %v582 = vunpack.c.0.s8 %v581
      %v583 = vlaneseq
      %v584 = vshrl.u32 %v583, 7
      %v585 = vsub.s32 %v582, %v584
      %v586 = vrot.slane %v578, %v585
      %v588 = vunpack.c.l.s4 1983009808
      %v589 = vunpack.c.0.s8 %v588
      %v590 = vlaneseq
      %v591 = vshrl.u32 %v590, 7
      %v592 = vsub.s32 %v589, %v591
      %v593 = vrot.slane %v579, %v592
      %v594 = vcombine.low %v493, %v501
      %v595 = vcombine.high %v493, %v501
      %v597 = vunpack.c.l.s4 1983009808
      %v598 = vunpack.c.0.s8 %v597
      %v599 = vlaneseq
      %v600 = vshrl.u32 %v599, 7
      %v601 = vsub.s32 %v598, %v600
      %v602 = vrot.slane %v594, %v601
      %v604 = vunpack.c.l.s4 1983009808
      %v605 = vunpack.c.0.s8 %v604
      %v606 = vlaneseq
      %v607 = vshrl.u32 %v606, 7
      %v608 = vsub.s32 %v605, %v607
      %v609 = vrot.slane %v595, %v608
      %v610 = vcombine.low %v586, %v602
      %v611 = vcombine.high %v586, %v602
      %v613 = vunpack.c.l.s4 1934713408
      %v614 = vunpack.c.0.s8 %v613
      %v615 = vlaneseq
      %v616 = vshrl.u32 %v615, 7
      %v617 = vsub.s32 %v614, %v616
      %v618 = vrot.slane %v610, %v617
      %v620 = vunpack.c.l.s4 1934713408
      %v621 = vunpack.c.0.s8 %v620
      %v622 = vlaneseq
      %v623 = vshrl.u32 %v622, 7
      %v624 = vsub.s32 %v621, %v623
      %v625 = vrot.slane %v611, %v624
      %v626 = vcombine.low %v593, %v609
      %v627 = vcombine.high %v593, %v609
      %v629 = vunpack.c.l.s4 1934713408
      %v630 = vunpack.c.0.s8 %v629
      %v631 = vlaneseq
      %v632 = vshrl.u32 %v631, 7
      %v633 = vsub.s32 %v630, %v632
      %v634 = vrot.slane %v626, %v633
      %v636 = vunpack.c.l.s4 1934713408
      %v637 = vunpack.c.0.s8 %v636
      %v638 = vlaneseq
      %v639 = vshrl.u32 %v638, 7
      %v640 = vsub.s32 %v637, %v639
      %v641 = vrot.slane %v627, %v640
      %v642 = vcombine.high %v618, 0.0
      %v643 = vcombine.high %v625, 0.0
      %v644 = vcombine.high %v634, 0.0
      %v645 = vcombine.high %v641, 0.0
      %647 = vrot.lane.b32.xlu0 %v574, 16
      %v648 = vpop.permute.xlu0 %647
      %651 = vrot.lane.b32.xlu0 %v557, 32
      %v652 = vpop.permute.xlu0 %651
      %655 = vrot.lane.b32.xlu0 %v575, 48
      %v656 = vpop.permute.xlu0 %655
      %659 = vrot.lane.b32.xlu0 %v566, 64
      %v660 = vpop.permute.xlu0 %659
      %663 = vrot.lane.b32.xlu0 %v576, 80
      %v664 = vpop.permute.xlu0 %663
      %667 = vrot.lane.b32.xlu0 %v573, 96
      %v668 = vpop.permute.xlu0 %667
      %671 = vrot.lane.b32.xlu0 %v577, 112
      %v672 = vpop.permute.xlu0 %671
      %675 = vrot.lane.b32.xlu0 %v642, 16
      %v676 = vpop.permute.xlu0 %675
      %679 = vrot.lane.b32.xlu0 %v625, 32
      %v680 = vpop.permute.xlu0 %679
      %683 = vrot.lane.b32.xlu0 %v643, 48
      %v684 = vpop.permute.xlu0 %683
      %687 = vrot.lane.b32.xlu0 %v634, 64
      %v688 = vpop.permute.xlu0 %687
      %691 = vrot.lane.b32.xlu0 %v644, 80
      %v692 = vpop.permute.xlu0 %691
      %695 = vrot.lane.b32.xlu0 %v641, 96
      %v696 = vpop.permute.xlu0 %695
      %699 = vrot.lane.b32.xlu0 %v645, 112
      %v700 = vpop.permute.xlu0 %699
      %v702 = vsel %vm457, %v550, %v648
      %v703 = vsel %vm459, %v702, %v652
      %v704 = vsel %vm461, %v703, %v656
      %v705 = vsel %vm463, %v704, %v660
      %v706 = vsel %vm465, %v705, %v664
      %v707 = vsel %vm467, %v706, %v668
      %v708 = vsel %vm469, %v707, %v672
      %v709 = vsel %vm457, %v618, %v676
      %v710 = vsel %vm459, %v709, %v680
      %v711 = vsel %vm461, %v710, %v684
      %v712 = vsel %vm463, %v711, %v688
      %v713 = vsel %vm465, %v712, %v692
      %v714 = vsel %vm467, %v713, %v696
      %v715 = vsel %vm469, %v714, %v700
      %716 = vrot.lane.b32.xlu0 %v253, 126
      %v717 = vpop.permute.xlu0 %716
      %718 = vrot.lane.b32.xlu0 %v254, 126
      %v719 = vpop.permute.xlu0 %718
      %720 = vrot.lane.b32.xlu0 %v256, 126
      %v721 = vpop.permute.xlu0 %720
      %722 = vrot.lane.b32.xlu0 %v257, 126
      %v723 = vpop.permute.xlu0 %722
      %724 = vrot.lane.b32.xlu0 %v259, 126
      %v725 = vpop.permute.xlu0 %724
      %726 = vrot.lane.b32.xlu0 %v260, 126
      %v727 = vpop.permute.xlu0 %726
      %728 = vrot.lane.b32.xlu0 %v262, 126
      %v729 = vpop.permute.xlu0 %728
      %730 = vrot.lane.b32.xlu0 %v263, 126
      %v731 = vpop.permute.xlu0 %730
      %v740 = vcombine.low %v717, %v725
      %v741 = vcombine.high %v717, %v725
      %v743 = vunpack.c.l.s4 1983009808
      %v744 = vunpack.c.0.s8 %v743
      %v745 = vlaneseq
      %v746 = vshrl.u32 %v745, 7
      %v747 = vsub.s32 %v744, %v746
      %v748 = vrot.slane %v740, %v747
      %v750 = vunpack.c.l.s4 1983009808
      %v751 = vunpack.c.0.s8 %v750
      %v752 = vlaneseq
      %v753 = vshrl.u32 %v752, 7
      %v754 = vsub.s32 %v751, %v753
      %v755 = vrot.slane %v741, %v754
      %v756 = vcombine.low %v721, %v729
      %v757 = vcombine.high %v721, %v729
      %v759 = vunpack.c.l.s4 1983009808
      %v760 = vunpack.c.0.s8 %v759
      %v761 = vlaneseq
      %v762 = vshrl.u32 %v761, 7
      %v763 = vsub.s32 %v760, %v762
      %v764 = vrot.slane %v756, %v763
      %v766 = vunpack.c.l.s4 1983009808
      %v767 = vunpack.c.0.s8 %v766
      %v768 = vlaneseq
      %v769 = vshrl.u32 %v768, 7
      %v770 = vsub.s32 %v767, %v769
      %v771 = vrot.slane %v757, %v770
      %v772 = vcombine.low %v748, %v764
      %v773 = vcombine.high %v748, %v764
      %v775 = vunpack.c.l.s4 1934713408
      %v776 = vunpack.c.0.s8 %v775
      %v777 = vlaneseq
      %v778 = vshrl.u32 %v777, 7
      %v779 = vsub.s32 %v776, %v778
      %v780 = vrot.slane %v772, %v779
      %v782 = vunpack.c.l.s4 1934713408
      %v783 = vunpack.c.0.s8 %v782
      %v784 = vlaneseq
      %v785 = vshrl.u32 %v784, 7
      %v786 = vsub.s32 %v783, %v785
      %v787 = vrot.slane %v773, %v786
      %v788 = vcombine.low %v755, %v771
      %v789 = vcombine.high %v755, %v771
      %v791 = vunpack.c.l.s4 1934713408
      %v792 = vunpack.c.0.s8 %v791
      %v793 = vlaneseq
      %v794 = vshrl.u32 %v793, 7
      %v795 = vsub.s32 %v792, %v794
      %v796 = vrot.slane %v788, %v795
      %v798 = vunpack.c.l.s4 1934713408
      %v799 = vunpack.c.0.s8 %v798
      %v800 = vlaneseq
      %v801 = vshrl.u32 %v800, 7
      %v802 = vsub.s32 %v799, %v801
      %v803 = vrot.slane %v789, %v802
      %v804 = vcombine.high %v780, 0.0
      %v805 = vcombine.high %v787, 0.0
      %v806 = vcombine.high %v796, 0.0
      %v807 = vcombine.high %v803, 0.0
      %v808 = vcombine.low %v719, %v727
      %v809 = vcombine.high %v719, %v727
      %v811 = vunpack.c.l.s4 1983009808
      %v812 = vunpack.c.0.s8 %v811
      %v813 = vlaneseq
      %v814 = vshrl.u32 %v813, 7
      %v815 = vsub.s32 %v812, %v814
      %v816 = vrot.slane %v808, %v815
      %v818 = vunpack.c.l.s4 1983009808
      %v819 = vunpack.c.0.s8 %v818
      %v820 = vlaneseq
      %v821 = vshrl.u32 %v820, 7
      %v822 = vsub.s32 %v819, %v821
      %v823 = vrot.slane %v809, %v822
      %v824 = vcombine.low %v723, %v731
      %v825 = vcombine.high %v723, %v731
      %v827 = vunpack.c.l.s4 1983009808
      %v828 = vunpack.c.0.s8 %v827
      %v829 = vlaneseq
      %v830 = vshrl.u32 %v829, 7
      %v831 = vsub.s32 %v828, %v830
      %v832 = vrot.slane %v824, %v831
      %v834 = vunpack.c.l.s4 1983009808
      %v835 = vunpack.c.0.s8 %v834
      %v836 = vlaneseq
      %v837 = vshrl.u32 %v836, 7
      %v838 = vsub.s32 %v835, %v837
      %v839 = vrot.slane %v825, %v838
      %v840 = vcombine.low %v816, %v832
      %v841 = vcombine.high %v816, %v832
      %v843 = vunpack.c.l.s4 1934713408
      %v844 = vunpack.c.0.s8 %v843
      %v845 = vlaneseq
      %v846 = vshrl.u32 %v845, 7
      %v847 = vsub.s32 %v844, %v846
      %v848 = vrot.slane %v840, %v847
      %v850 = vunpack.c.l.s4 1934713408
      %v851 = vunpack.c.0.s8 %v850
      %v852 = vlaneseq
      %v853 = vshrl.u32 %v852, 7
      %v854 = vsub.s32 %v851, %v853
      %v855 = vrot.slane %v841, %v854
      %v856 = vcombine.low %v823, %v839
      %v857 = vcombine.high %v823, %v839
      %v859 = vunpack.c.l.s4 1934713408
      %v860 = vunpack.c.0.s8 %v859
      %v861 = vlaneseq
      %v862 = vshrl.u32 %v861, 7
      %v863 = vsub.s32 %v860, %v862
      %v864 = vrot.slane %v856, %v863
      %v866 = vunpack.c.l.s4 1934713408
      %v867 = vunpack.c.0.s8 %v866
      %v868 = vlaneseq
      %v869 = vshrl.u32 %v868, 7
      %v870 = vsub.s32 %v867, %v869
      %v871 = vrot.slane %v857, %v870
      %v872 = vcombine.high %v848, 0.0
      %v873 = vcombine.high %v855, 0.0
      %v874 = vcombine.high %v864, 0.0
      %v875 = vcombine.high %v871, 0.0
      %877 = vrot.lane.b32.xlu0 %v804, 16
      %v878 = vpop.permute.xlu0 %877
      %881 = vrot.lane.b32.xlu0 %v787, 32
      %v882 = vpop.permute.xlu0 %881
      %885 = vrot.lane.b32.xlu0 %v805, 48
      %v886 = vpop.permute.xlu0 %885
      %889 = vrot.lane.b32.xlu0 %v796, 64
      %v890 = vpop.permute.xlu0 %889
      %893 = vrot.lane.b32.xlu0 %v806, 80
      %v894 = vpop.permute.xlu0 %893
      %897 = vrot.lane.b32.xlu0 %v803, 96
      %v898 = vpop.permute.xlu0 %897
      %901 = vrot.lane.b32.xlu0 %v807, 112
      %v902 = vpop.permute.xlu0 %901
      %905 = vrot.lane.b32.xlu0 %v872, 16
      %v906 = vpop.permute.xlu0 %905
      %909 = vrot.lane.b32.xlu0 %v855, 32
      %v910 = vpop.permute.xlu0 %909
      %913 = vrot.lane.b32.xlu0 %v873, 48
      %v914 = vpop.permute.xlu0 %913
      %917 = vrot.lane.b32.xlu0 %v864, 64
      %v918 = vpop.permute.xlu0 %917
      %921 = vrot.lane.b32.xlu0 %v874, 80
      %v922 = vpop.permute.xlu0 %921
      %925 = vrot.lane.b32.xlu0 %v871, 96
      %v926 = vpop.permute.xlu0 %925
      %929 = vrot.lane.b32.xlu0 %v875, 112
      %v930 = vpop.permute.xlu0 %929
      %v932 = vsel %vm457, %v780, %v878
      %v933 = vsel %vm459, %v932, %v882
      %v934 = vsel %vm461, %v933, %v886
      %v935 = vsel %vm463, %v934, %v890
      %v936 = vsel %vm465, %v935, %v894
      %v937 = vsel %vm467, %v936, %v898
      %v938 = vsel %vm469, %v937, %v902
      %v939 = vsel %vm457, %v848, %v906
      %v940 = vsel %vm459, %v939, %v910
      %v941 = vsel %vm461, %v940, %v914
      %v942 = vsel %vm463, %v941, %v918
      %v943 = vsel %vm465, %v942, %v922
      %v944 = vsel %vm467, %v943, %v926
      %v945 = vsel %vm469, %v944, %v930
      %vm950 = vcmask 1046528
      %v951 = vrot.slane %v253, 1
      %v952 = vrot.slane %v254, 1
      %v953 = vsel %vm950, %v951, %v952
      %v954 = vrot.slane %v255, 1
      %v955 = vsel %vm950, %v952, %v954
      %v956 = vrot.slane %v256, 1
      %v957 = vrot.slane %v257, 1
      %v958 = vsel %vm950, %v956, %v957
      %v959 = vrot.slane %v258, 1
      %v960 = vsel %vm950, %v957, %v959
      %v961 = vrot.slane %v259, 1
      %v962 = vrot.slane %v260, 1
      %v963 = vsel %vm950, %v961, %v962
      %v964 = vrot.slane %v261, 1
      %v965 = vsel %vm950, %v962, %v964
      %v966 = vrot.slane %v262, 1
      %v967 = vrot.slane %v263, 1
      %v968 = vsel %vm950, %v966, %v967
      %v969 = vrot.slane %v264, 1
      %v970 = vsel %vm950, %v967, %v969
      %v979 = vcombine.low %v953, %v963
      %v980 = vcombine.high %v953, %v963
      %v982 = vunpack.c.l.s4 1983009808
      %v983 = vunpack.c.0.s8 %v982
      %v984 = vlaneseq
      %v985 = vshrl.u32 %v984, 7
      %v986 = vsub.s32 %v983, %v985
      %v987 = vrot.slane %v979, %v986
      %v989 = vunpack.c.l.s4 1983009808
      %v990 = vunpack.c.0.s8 %v989
      %v991 = vlaneseq
      %v992 = vshrl.u32 %v991, 7
      %v993 = vsub.s32 %v990, %v992
      %v994 = vrot.slane %v980, %v993
      %v995 = vcombine.low %v958, %v968
      %v996 = vcombine.high %v958, %v968
      %v998 = vunpack.c.l.s4 1983009808
      %v999 = vunpack.c.0.s8 %v998
      %v1000 = vlaneseq
      %v1001 = vshrl.u32 %v1000, 7
      %v1002 = vsub.s32 %v999, %v1001
      %v1003 = vrot.slane %v995, %v1002
      %v1005 = vunpack.c.l.s4 1983009808
      %v1006 = vunpack.c.0.s8 %v1005
      %v1007 = vlaneseq
      %v1008 = vshrl.u32 %v1007, 7
      %v1009 = vsub.s32 %v1006, %v1008
      %v1010 = vrot.slane %v996, %v1009
      %v1011 = vcombine.low %v987, %v1003
      %v1012 = vcombine.high %v987, %v1003
      %v1014 = vunpack.c.l.s4 1934713408
      %v1015 = vunpack.c.0.s8 %v1014
      %v1016 = vlaneseq
      %v1017 = vshrl.u32 %v1016, 7
      %v1018 = vsub.s32 %v1015, %v1017
      %v1019 = vrot.slane %v1011, %v1018
      %v1021 = vunpack.c.l.s4 1934713408
      %v1022 = vunpack.c.0.s8 %v1021
      %v1023 = vlaneseq
      %v1024 = vshrl.u32 %v1023, 7
      %v1025 = vsub.s32 %v1022, %v1024
      %v1026 = vrot.slane %v1012, %v1025
      %v1027 = vcombine.low %v994, %v1010
      %v1028 = vcombine.high %v994, %v1010
      %v1030 = vunpack.c.l.s4 1934713408
      %v1031 = vunpack.c.0.s8 %v1030
      %v1032 = vlaneseq
      %v1033 = vshrl.u32 %v1032, 7
      %v1034 = vsub.s32 %v1031, %v1033
      %v1035 = vrot.slane %v1027, %v1034
      %v1037 = vunpack.c.l.s4 1934713408
      %v1038 = vunpack.c.0.s8 %v1037
      %v1039 = vlaneseq
      %v1040 = vshrl.u32 %v1039, 7
      %v1041 = vsub.s32 %v1038, %v1040
      %v1042 = vrot.slane %v1028, %v1041
      %v1043 = vcombine.high %v1019, 0.0
      %v1044 = vcombine.high %v1026, 0.0
      %v1045 = vcombine.high %v1035, 0.0
      %v1046 = vcombine.high %v1042, 0.0
      %v1047 = vcombine.low %v955, %v965
      %v1048 = vcombine.high %v955, %v965
      %v1050 = vunpack.c.l.s4 1983009808
      %v1051 = vunpack.c.0.s8 %v1050
      %v1052 = vlaneseq
      %v1053 = vshrl.u32 %v1052, 7
      %v1054 = vsub.s32 %v1051, %v1053
      %v1055 = vrot.slane %v1047, %v1054
      %v1057 = vunpack.c.l.s4 1983009808
      %v1058 = vunpack.c.0.s8 %v1057
      %v1059 = vlaneseq
      %v1060 = vshrl.u32 %v1059, 7
      %v1061 = vsub.s32 %v1058, %v1060
      %v1062 = vrot.slane %v1048, %v1061
      %v1063 = vcombine.low %v960, %v970
      %v1064 = vcombine.high %v960, %v970
      %v1066 = vunpack.c.l.s4 1983009808
      %v1067 = vunpack.c.0.s8 %v1066
      %v1068 = vlaneseq
      %v1069 = vshrl.u32 %v1068, 7
      %v1070 = vsub.s32 %v1067, %v1069
      %v1071 = vrot.slane %v1063, %v1070
      %v1073 = vunpack.c.l.s4 1983009808
      %v1074 = vunpack.c.0.s8 %v1073
      %v1075 = vlaneseq
      %v1076 = vshrl.u32 %v1075, 7
      %v1077 = vsub.s32 %v1074, %v1076
      %v1078 = vrot.slane %v1064, %v1077
      %v1079 = vcombine.low %v1055, %v1071
      %v1080 = vcombine.high %v1055, %v1071
      %v1082 = vunpack.c.l.s4 1934713408
      %v1083 = vunpack.c.0.s8 %v1082
      %v1084 = vlaneseq
      %v1085 = vshrl.u32 %v1084, 7
      %v1086 = vsub.s32 %v1083, %v1085
      %v1087 = vrot.slane %v1079, %v1086
      %v1089 = vunpack.c.l.s4 1934713408
      %v1090 = vunpack.c.0.s8 %v1089
      %v1091 = vlaneseq
      %v1092 = vshrl.u32 %v1091, 7
      %v1093 = vsub.s32 %v1090, %v1092
      %v1094 = vrot.slane %v1080, %v1093
      %v1095 = vcombine.low %v1062, %v1078
      %v1096 = vcombine.high %v1062, %v1078
      %v1098 = vunpack.c.l.s4 1934713408
      %v1099 = vunpack.c.0.s8 %v1098
      %v1100 = vlaneseq
      %v1101 = vshrl.u32 %v1100, 7
      %v1102 = vsub.s32 %v1099, %v1101
      %v1103 = vrot.slane %v1095, %v1102
      %v1105 = vunpack.c.l.s4 1934713408
      %v1106 = vunpack.c.0.s8 %v1105
      %v1107 = vlaneseq
      %v1108 = vshrl.u32 %v1107, 7
      %v1109 = vsub.s32 %v1106, %v1108
      %v1110 = vrot.slane %v1096, %v1109
      %v1111 = vcombine.high %v1087, 0.0
      %v1112 = vcombine.high %v1094, 0.0
      %v1113 = vcombine.high %v1103, 0.0
      %v1114 = vcombine.high %v1110, 0.0
      %1116 = vrot.lane.b32.xlu0 %v1043, 16
      %v1117 = vpop.permute.xlu0 %1116
      %1120 = vrot.lane.b32.xlu0 %v1026, 32
      %v1121 = vpop.permute.xlu0 %1120
      %1124 = vrot.lane.b32.xlu0 %v1044, 48
      %v1125 = vpop.permute.xlu0 %1124
      %1128 = vrot.lane.b32.xlu0 %v1035, 64
      %v1129 = vpop.permute.xlu0 %1128
      %1132 = vrot.lane.b32.xlu0 %v1045, 80
      %v1133 = vpop.permute.xlu0 %1132
      %1136 = vrot.lane.b32.xlu0 %v1042, 96
      %v1137 = vpop.permute.xlu0 %1136
      %1140 = vrot.lane.b32.xlu0 %v1046, 112
      %v1141 = vpop.permute.xlu0 %1140
      %1144 = vrot.lane.b32.xlu0 %v1111, 16
      %v1145 = vpop.permute.xlu0 %1144
      %1148 = vrot.lane.b32.xlu0 %v1094, 32
      %v1149 = vpop.permute.xlu0 %1148
      %1152 = vrot.lane.b32.xlu0 %v1112, 48
      %v1153 = vpop.permute.xlu0 %1152
      %1156 = vrot.lane.b32.xlu0 %v1103, 64
      %v1157 = vpop.permute.xlu0 %1156
      %1160 = vrot.lane.b32.xlu0 %v1113, 80
      %v1161 = vpop.permute.xlu0 %1160
      %1164 = vrot.lane.b32.xlu0 %v1110, 96
      %v1165 = vpop.permute.xlu0 %1164
      %1168 = vrot.lane.b32.xlu0 %v1114, 112
      %v1169 = vpop.permute.xlu0 %1168
      %v1171 = vsel %vm457, %v1019, %v1117
      %v1172 = vsel %vm459, %v1171, %v1121
      %v1173 = vsel %vm461, %v1172, %v1125
      %v1174 = vsel %vm463, %v1173, %v1129
      %v1175 = vsel %vm465, %v1174, %v1133
      %v1176 = vsel %vm467, %v1175, %v1137
      %v1177 = vsel %vm469, %v1176, %v1141
      %v1178 = vsel %vm457, %v1087, %v1145
      %v1179 = vsel %vm459, %v1178, %v1149
      %v1180 = vsel %vm461, %v1179, %v1153
      %v1181 = vsel %vm463, %v1180, %v1157
      %v1182 = vsel %vm465, %v1181, %v1161
      %v1183 = vsel %vm467, %v1182, %v1165
      %v1184 = vsel %vm469, %v1183, %v1169
      %1185 = vrot.lane.b32.xlu0 %v953, 127
      %v1186 = vpop.permute.xlu0 %1185
      %1187 = vrot.lane.b32.xlu0 %v955, 127
      %v1188 = vpop.permute.xlu0 %1187
      %1189 = vrot.lane.b32.xlu0 %v958, 127
      %v1190 = vpop.permute.xlu0 %1189
      %1191 = vrot.lane.b32.xlu0 %v960, 127
      %v1192 = vpop.permute.xlu0 %1191
      %1193 = vrot.lane.b32.xlu0 %v963, 127
      %v1194 = vpop.permute.xlu0 %1193
      %1195 = vrot.lane.b32.xlu0 %v965, 127
      %v1196 = vpop.permute.xlu0 %1195
      %1197 = vrot.lane.b32.xlu0 %v968, 127
      %v1198 = vpop.permute.xlu0 %1197
      %1199 = vrot.lane.b32.xlu0 %v970, 127
      %v1200 = vpop.permute.xlu0 %1199
      %v1209 = vcombine.low %v1186, %v1194
      %v1210 = vcombine.high %v1186, %v1194
      %v1212 = vunpack.c.l.s4 1983009808
      %v1213 = vunpack.c.0.s8 %v1212
      %v1214 = vlaneseq
      %v1215 = vshrl.u32 %v1214, 7
      %v1216 = vsub.s32 %v1213, %v1215
      %v1217 = vrot.slane %v1209, %v1216
      %v1219 = vunpack.c.l.s4 1983009808
      %v1220 = vunpack.c.0.s8 %v1219
      %v1221 = vlaneseq
      %v1222 = vshrl.u32 %v1221, 7
      %v1223 = vsub.s32 %v1220, %v1222
      %v1224 = vrot.slane %v1210, %v1223
      %v1225 = vcombine.low %v1190, %v1198
      %v1226 = vcombine.high %v1190, %v1198
      %v1228 = vunpack.c.l.s4 1983009808
      %v1229 = vunpack.c.0.s8 %v1228
      %v1230 = vlaneseq
      %v1231 = vshrl.u32 %v1230, 7
      %v1232 = vsub.s32 %v1229, %v1231
      %v1233 = vrot.slane %v1225, %v1232
      %v1235 = vunpack.c.l.s4 1983009808
      %v1236 = vunpack.c.0.s8 %v1235
      %v1237 = vlaneseq
      %v1238 = vshrl.u32 %v1237, 7
      %v1239 = vsub.s32 %v1236, %v1238
      %v1240 = vrot.slane %v1226, %v1239
      %v1241 = vcombine.low %v1217, %v1233
      %v1242 = vcombine.high %v1217, %v1233
      %v1244 = vunpack.c.l.s4 1934713408
      %v1245 = vunpack.c.0.s8 %v1244
      %v1246 = vlaneseq
      %v1247 = vshrl.u32 %v1246, 7
      %v1248 = vsub.s32 %v1245, %v1247
      %v1249 = vrot.slane %v1241, %v1248
      %v1251 = vunpack.c.l.s4 1934713408
      %v1252 = vunpack.c.0.s8 %v1251
      %v1253 = vlaneseq
      %v1254 = vshrl.u32 %v1253, 7
      %v1255 = vsub.s32 %v1252, %v1254
      %v1256 = vrot.slane %v1242, %v1255
      %v1257 = vcombine.low %v1224, %v1240
      %v1258 = vcombine.high %v1224, %v1240
      %v1260 = vunpack.c.l.s4 1934713408
      %v1261 = vunpack.c.0.s8 %v1260
      %v1262 = vlaneseq
      %v1263 = vshrl.u32 %v1262, 7
      %v1264 = vsub.s32 %v1261, %v1263
      %v1265 = vrot.slane %v1257, %v1264
      %v1267 = vunpack.c.l.s4 1934713408
      %v1268 = vunpack.c.0.s8 %v1267
      %v1269 = vlaneseq
      %v1270 = vshrl.u32 %v1269, 7
      %v1271 = vsub.s32 %v1268, %v1270
      %v1272 = vrot.slane %v1258, %v1271
      %v1273 = vcombine.high %v1249, 0.0
      %v1274 = vcombine.high %v1256, 0.0
      %v1275 = vcombine.high %v1265, 0.0
      %v1276 = vcombine.high %v1272, 0.0
      %v1277 = vcombine.low %v1188, %v1196
      %v1278 = vcombine.high %v1188, %v1196
      %v1280 = vunpack.c.l.s4 1983009808
      %v1281 = vunpack.c.0.s8 %v1280
      %v1282 = vlaneseq
      %v1283 = vshrl.u32 %v1282, 7
      %v1284 = vsub.s32 %v1281, %v1283
      %v1285 = vrot.slane %v1277, %v1284
      %v1287 = vunpack.c.l.s4 1983009808
      %v1288 = vunpack.c.0.s8 %v1287
      %v1289 = vlaneseq
      %v1290 = vshrl.u32 %v1289, 7
      %v1291 = vsub.s32 %v1288, %v1290
      %v1292 = vrot.slane %v1278, %v1291
      %v1293 = vcombine.low %v1192, %v1200
      %v1294 = vcombine.high %v1192, %v1200
      %v1296 = vunpack.c.l.s4 1983009808
      %v1297 = vunpack.c.0.s8 %v1296
      %v1298 = vlaneseq
      %v1299 = vshrl.u32 %v1298, 7
      %v1300 = vsub.s32 %v1297, %v1299
      %v1301 = vrot.slane %v1293, %v1300
      %v1303 = vunpack.c.l.s4 1983009808
      %v1304 = vunpack.c.0.s8 %v1303
      %v1305 = vlaneseq
      %v1306 = vshrl.u32 %v1305, 7
      %v1307 = vsub.s32 %v1304, %v1306
      %v1308 = vrot.slane %v1294, %v1307
      %v1309 = vcombine.low %v1285, %v1301
      %v1310 = vcombine.high %v1285, %v1301
      %v1312 = vunpack.c.l.s4 1934713408
      %v1313 = vunpack.c.0.s8 %v1312
      %v1314 = vlaneseq
      %v1315 = vshrl.u32 %v1314, 7
      %v1316 = vsub.s32 %v1313, %v1315
      %v1317 = vrot.slane %v1309, %v1316
      %v1319 = vunpack.c.l.s4 1934713408
      %v1320 = vunpack.c.0.s8 %v1319
      %v1321 = vlaneseq
      %v1322 = vshrl.u32 %v1321, 7
      %v1323 = vsub.s32 %v1320, %v1322
      %v1324 = vrot.slane %v1310, %v1323
      %v1325 = vcombine.low %v1292, %v1308
      %v1326 = vcombine.high %v1292, %v1308
      %v1328 = vunpack.c.l.s4 1934713408
      %v1329 = vunpack.c.0.s8 %v1328
      %v1330 = vlaneseq
      %v1331 = vshrl.u32 %v1330, 7
      %v1332 = vsub.s32 %v1329, %v1331
      %v1333 = vrot.slane %v1325, %v1332
      %v1335 = vunpack.c.l.s4 1934713408
      %v1336 = vunpack.c.0.s8 %v1335
      %v1337 = vlaneseq
      %v1338 = vshrl.u32 %v1337, 7
      %v1339 = vsub.s32 %v1336, %v1338
      %v1340 = vrot.slane %v1326, %v1339
      %v1341 = vcombine.high %v1317, 0.0
      %v1342 = vcombine.high %v1324, 0.0
      %v1343 = vcombine.high %v1333, 0.0
      %v1344 = vcombine.high %v1340, 0.0
      %1346 = vrot.lane.b32.xlu0 %v1273, 16
      %v1347 = vpop.permute.xlu0 %1346
      %1350 = vrot.lane.b32.xlu0 %v1256, 32
      %v1351 = vpop.permute.xlu0 %1350
      %1354 = vrot.lane.b32.xlu0 %v1274, 48
      %v1355 = vpop.permute.xlu0 %1354
      %1358 = vrot.lane.b32.xlu0 %v1265, 64
      %v1359 = vpop.permute.xlu0 %1358
      %1362 = vrot.lane.b32.xlu0 %v1275, 80
      %v1363 = vpop.permute.xlu0 %1362
      %1366 = vrot.lane.b32.xlu0 %v1272, 96
      %v1367 = vpop.permute.xlu0 %1366
      %1370 = vrot.lane.b32.xlu0 %v1276, 112
      %v1371 = vpop.permute.xlu0 %1370
      %1374 = vrot.lane.b32.xlu0 %v1341, 16
      %v1375 = vpop.permute.xlu0 %1374
      %1378 = vrot.lane.b32.xlu0 %v1324, 32
      %v1379 = vpop.permute.xlu0 %1378
      %1382 = vrot.lane.b32.xlu0 %v1342, 48
      %v1383 = vpop.permute.xlu0 %1382
      %1386 = vrot.lane.b32.xlu0 %v1333, 64
      %v1387 = vpop.permute.xlu0 %1386
      %1390 = vrot.lane.b32.xlu0 %v1343, 80
      %v1391 = vpop.permute.xlu0 %1390
      %1394 = vrot.lane.b32.xlu0 %v1340, 96
      %v1395 = vpop.permute.xlu0 %1394
      %1398 = vrot.lane.b32.xlu0 %v1344, 112
      %v1399 = vpop.permute.xlu0 %1398
      %v1401 = vsel %vm457, %v1249, %v1347
      %v1402 = vsel %vm459, %v1401, %v1351
      %v1403 = vsel %vm461, %v1402, %v1355
      %v1404 = vsel %vm463, %v1403, %v1359
      %v1405 = vsel %vm465, %v1404, %v1363
      %v1406 = vsel %vm467, %v1405, %v1367
      %v1407 = vsel %vm469, %v1406, %v1371
      %v1408 = vsel %vm457, %v1317, %v1375
      %v1409 = vsel %vm459, %v1408, %v1379
      %v1410 = vsel %vm461, %v1409, %v1383
      %v1411 = vsel %vm463, %v1410, %v1387
      %v1412 = vsel %vm465, %v1411, %v1391
      %v1413 = vsel %vm467, %v1412, %v1395
      %v1414 = vsel %vm469, %v1413, %v1399
      %1415 = vrot.lane.b32.xlu0 %v953, 126
      %v1416 = vpop.permute.xlu0 %1415
      %1417 = vrot.lane.b32.xlu0 %v955, 126
      %v1418 = vpop.permute.xlu0 %1417
      %1419 = vrot.lane.b32.xlu0 %v958, 126
      %v1420 = vpop.permute.xlu0 %1419
      %1421 = vrot.lane.b32.xlu0 %v960, 126
      %v1422 = vpop.permute.xlu0 %1421
      %1423 = vrot.lane.b32.xlu0 %v963, 126
      %v1424 = vpop.permute.xlu0 %1423
      %1425 = vrot.lane.b32.xlu0 %v965, 126
      %v1426 = vpop.permute.xlu0 %1425
      %1427 = vrot.lane.b32.xlu0 %v968, 126
      %v1428 = vpop.permute.xlu0 %1427
      %1429 = vrot.lane.b32.xlu0 %v970, 126
      %v1430 = vpop.permute.xlu0 %1429
      %v1439 = vcombine.low %v1416, %v1424
      %v1440 = vcombine.high %v1416, %v1424
      %v1442 = vunpack.c.l.s4 1983009808
      %v1443 = vunpack.c.0.s8 %v1442
      %v1444 = vlaneseq
      %v1445 = vshrl.u32 %v1444, 7
      %v1446 = vsub.s32 %v1443, %v1445
      %v1447 = vrot.slane %v1439, %v1446
      %v1449 = vunpack.c.l.s4 1983009808
      %v1450 = vunpack.c.0.s8 %v1449
      %v1451 = vlaneseq
      %v1452 = vshrl.u32 %v1451, 7
      %v1453 = vsub.s32 %v1450, %v1452
      %v1454 = vrot.slane %v1440, %v1453
      %v1455 = vcombine.low %v1420, %v1428
      %v1456 = vcombine.high %v1420, %v1428
      %v1458 = vunpack.c.l.s4 1983009808
      %v1459 = vunpack.c.0.s8 %v1458
      %v1460 = vlaneseq
      %v1461 = vshrl.u32 %v1460, 7
      %v1462 = vsub.s32 %v1459, %v1461
      %v1463 = vrot.slane %v1455, %v1462
      %v1465 = vunpack.c.l.s4 1983009808
      %v1466 = vunpack.c.0.s8 %v1465
      %v1467 = vlaneseq
      %v1468 = vshrl.u32 %v1467, 7
      %v1469 = vsub.s32 %v1466, %v1468
      %v1470 = vrot.slane %v1456, %v1469
      %v1471 = vcombine.low %v1447, %v1463
      %v1472 = vcombine.high %v1447, %v1463
      %v1474 = vunpack.c.l.s4 1934713408
      %v1475 = vunpack.c.0.s8 %v1474
      %v1476 = vlaneseq
      %v1477 = vshrl.u32 %v1476, 7
      %v1478 = vsub.s32 %v1475, %v1477
      %v1479 = vrot.slane %v1471, %v1478
      %v1481 = vunpack.c.l.s4 1934713408
      %v1482 = vunpack.c.0.s8 %v1481
      %v1483 = vlaneseq
      %v1484 = vshrl.u32 %v1483, 7
      %v1485 = vsub.s32 %v1482, %v1484
      %v1486 = vrot.slane %v1472, %v1485
      %v1487 = vcombine.low %v1454, %v1470
      %v1488 = vcombine.high %v1454, %v1470
      %v1490 = vunpack.c.l.s4 1934713408
      %v1491 = vunpack.c.0.s8 %v1490
      %v1492 = vlaneseq
      %v1493 = vshrl.u32 %v1492, 7
      %v1494 = vsub.s32 %v1491, %v1493
      %v1495 = vrot.slane %v1487, %v1494
      %v1497 = vunpack.c.l.s4 1934713408
      %v1498 = vunpack.c.0.s8 %v1497
      %v1499 = vlaneseq
      %v1500 = vshrl.u32 %v1499, 7
      %v1501 = vsub.s32 %v1498, %v1500
      %v1502 = vrot.slane %v1488, %v1501
      %v1503 = vcombine.high %v1479, 0.0
      %v1504 = vcombine.high %v1486, 0.0
      %v1505 = vcombine.high %v1495, 0.0
      %v1506 = vcombine.high %v1502, 0.0
      %v1507 = vcombine.low %v1418, %v1426
      %v1508 = vcombine.high %v1418, %v1426
      %v1510 = vunpack.c.l.s4 1983009808
      %v1511 = vunpack.c.0.s8 %v1510
      %v1512 = vlaneseq
      %v1513 = vshrl.u32 %v1512, 7
      %v1514 = vsub.s32 %v1511, %v1513
      %v1515 = vrot.slane %v1507, %v1514
      %v1517 = vunpack.c.l.s4 1983009808
      %v1518 = vunpack.c.0.s8 %v1517
      %v1519 = vlaneseq
      %v1520 = vshrl.u32 %v1519, 7
      %v1521 = vsub.s32 %v1518, %v1520
      %v1522 = vrot.slane %v1508, %v1521
      %v1523 = vcombine.low %v1422, %v1430
      %v1524 = vcombine.high %v1422, %v1430
      %v1526 = vunpack.c.l.s4 1983009808
      %v1527 = vunpack.c.0.s8 %v1526
      %v1528 = vlaneseq
      %v1529 = vshrl.u32 %v1528, 7
      %v1530 = vsub.s32 %v1527, %v1529
      %v1531 = vrot.slane %v1523, %v1530
      %v1533 = vunpack.c.l.s4 1983009808
      %v1534 = vunpack.c.0.s8 %v1533
      %v1535 = vlaneseq
      %v1536 = vshrl.u32 %v1535, 7
      %v1537 = vsub.s32 %v1534, %v1536
      %v1538 = vrot.slane %v1524, %v1537
      %v1539 = vcombine.low %v1515, %v1531
      %v1540 = vcombine.high %v1515, %v1531
      %v1542 = vunpack.c.l.s4 1934713408
      %v1543 = vunpack.c.0.s8 %v1542
      %v1544 = vlaneseq
      %v1545 = vshrl.u32 %v1544, 7
      %v1546 = vsub.s32 %v1543, %v1545
      %v1547 = vrot.slane %v1539, %v1546
      %v1549 = vunpack.c.l.s4 1934713408
      %v1550 = vunpack.c.0.s8 %v1549
      %v1551 = vlaneseq
      %v1552 = vshrl.u32 %v1551, 7
      %v1553 = vsub.s32 %v1550, %v1552
      %v1554 = vrot.slane %v1540, %v1553
      %v1555 = vcombine.low %v1522, %v1538
      %v1556 = vcombine.high %v1522, %v1538
      %v1558 = vunpack.c.l.s4 1934713408
      %v1559 = vunpack.c.0.s8 %v1558
      %v1560 = vlaneseq
      %v1561 = vshrl.u32 %v1560, 7
      %v1562 = vsub.s32 %v1559, %v1561
      %v1563 = vrot.slane %v1555, %v1562
      %v1565 = vunpack.c.l.s4 1934713408
      %v1566 = vunpack.c.0.s8 %v1565
      %v1567 = vlaneseq
      %v1568 = vshrl.u32 %v1567, 7
      %v1569 = vsub.s32 %v1566, %v1568
      %v1570 = vrot.slane %v1556, %v1569
      %v1571 = vcombine.high %v1547, 0.0
      %v1572 = vcombine.high %v1554, 0.0
      %v1573 = vcombine.high %v1563, 0.0
      %v1574 = vcombine.high %v1570, 0.0
      %1576 = vrot.lane.b32.xlu0 %v1503, 16
      %v1577 = vpop.permute.xlu0 %1576
      %1580 = vrot.lane.b32.xlu0 %v1486, 32
      %v1581 = vpop.permute.xlu0 %1580
      %1584 = vrot.lane.b32.xlu0 %v1504, 48
      %v1585 = vpop.permute.xlu0 %1584
      %1588 = vrot.lane.b32.xlu0 %v1495, 64
      %v1589 = vpop.permute.xlu0 %1588
      %1592 = vrot.lane.b32.xlu0 %v1505, 80
      %v1593 = vpop.permute.xlu0 %1592
      %1596 = vrot.lane.b32.xlu0 %v1502, 96
      %v1597 = vpop.permute.xlu0 %1596
      %1600 = vrot.lane.b32.xlu0 %v1506, 112
      %v1601 = vpop.permute.xlu0 %1600
      %1604 = vrot.lane.b32.xlu0 %v1571, 16
      %v1605 = vpop.permute.xlu0 %1604
      %1608 = vrot.lane.b32.xlu0 %v1554, 32
      %v1609 = vpop.permute.xlu0 %1608
      %1612 = vrot.lane.b32.xlu0 %v1572, 48
      %v1613 = vpop.permute.xlu0 %1612
      %1616 = vrot.lane.b32.xlu0 %v1563, 64
      %v1617 = vpop.permute.xlu0 %1616
      %1620 = vrot.lane.b32.xlu0 %v1573, 80
      %v1621 = vpop.permute.xlu0 %1620
      %1624 = vrot.lane.b32.xlu0 %v1570, 96
      %v1625 = vpop.permute.xlu0 %1624
      %1628 = vrot.lane.b32.xlu0 %v1574, 112
      %v1629 = vpop.permute.xlu0 %1628
      %v1631 = vsel %vm457, %v1479, %v1577
      %v1632 = vsel %vm459, %v1631, %v1581
      %v1633 = vsel %vm461, %v1632, %v1585
      %v1634 = vsel %vm463, %v1633, %v1589
      %v1635 = vsel %vm465, %v1634, %v1593
      %v1636 = vsel %vm467, %v1635, %v1597
      %v1637 = vsel %vm469, %v1636, %v1601
      %v1638 = vsel %vm457, %v1547, %v1605
      %v1639 = vsel %vm459, %v1638, %v1609
      %v1640 = vsel %vm461, %v1639, %v1613
      %v1641 = vsel %vm463, %v1640, %v1617
      %v1642 = vsel %vm465, %v1641, %v1621
      %v1643 = vsel %vm467, %v1642, %v1625
      %v1644 = vsel %vm469, %v1643, %v1629
      %vm1645 = vcmask 1045504
      %v1646 = vrot.slane %v253, 2
      %v1647 = vrot.slane %v254, 2
      %v1648 = vsel %vm1645, %v1646, %v1647
      %v1649 = vrot.slane %v255, 2
      %v1650 = vsel %vm1645, %v1647, %v1649
      %v1651 = vrot.slane %v256, 2
      %v1652 = vrot.slane %v257, 2
      %v1653 = vsel %vm1645, %v1651, %v1652
      %v1654 = vrot.slane %v258, 2
      %v1655 = vsel %vm1645, %v1652, %v1654
      %v1656 = vrot.slane %v259, 2
      %v1657 = vrot.slane %v260, 2
      %v1658 = vsel %vm1645, %v1656, %v1657
      %v1659 = vrot.slane %v261, 2
      %v1660 = vsel %vm1645, %v1657, %v1659
      %v1661 = vrot.slane %v262, 2
      %v1662 = vrot.slane %v263, 2
      %v1663 = vsel %vm1645, %v1661, %v1662
      %v1664 = vrot.slane %v264, 2
      %v1665 = vsel %vm1645, %v1662, %v1664
      %v1674 = vcombine.low %v1648, %v1658
      %v1675 = vcombine.high %v1648, %v1658
      %v1677 = vunpack.c.l.s4 1983009808
      %v1678 = vunpack.c.0.s8 %v1677
      %v1679 = vlaneseq
      %v1680 = vshrl.u32 %v1679, 7
      %v1681 = vsub.s32 %v1678, %v1680
      %v1682 = vrot.slane %v1674, %v1681
      %v1684 = vunpack.c.l.s4 1983009808
      %v1685 = vunpack.c.0.s8 %v1684
      %v1686 = vlaneseq
      %v1687 = vshrl.u32 %v1686, 7
      %v1688 = vsub.s32 %v1685, %v1687
      %v1689 = vrot.slane %v1675, %v1688
      %v1690 = vcombine.low %v1653, %v1663
      %v1691 = vcombine.high %v1653, %v1663
      %v1693 = vunpack.c.l.s4 1983009808
      %v1694 = vunpack.c.0.s8 %v1693
      %v1695 = vlaneseq
      %v1696 = vshrl.u32 %v1695, 7
      %v1697 = vsub.s32 %v1694, %v1696
      %v1698 = vrot.slane %v1690, %v1697
      %v1700 = vunpack.c.l.s4 1983009808
      %v1701 = vunpack.c.0.s8 %v1700
      %v1702 = vlaneseq
      %v1703 = vshrl.u32 %v1702, 7
      %v1704 = vsub.s32 %v1701, %v1703
      %v1705 = vrot.slane %v1691, %v1704
      %v1706 = vcombine.low %v1682, %v1698
      %v1707 = vcombine.high %v1682, %v1698
      %v1709 = vunpack.c.l.s4 1934713408
      %v1710 = vunpack.c.0.s8 %v1709
      %v1711 = vlaneseq
      %v1712 = vshrl.u32 %v1711, 7
      %v1713 = vsub.s32 %v1710, %v1712
      %v1714 = vrot.slane %v1706, %v1713
      %v1716 = vunpack.c.l.s4 1934713408
      %v1717 = vunpack.c.0.s8 %v1716
      %v1718 = vlaneseq
      %v1719 = vshrl.u32 %v1718, 7
      %v1720 = vsub.s32 %v1717, %v1719
      %v1721 = vrot.slane %v1707, %v1720
      %v1722 = vcombine.low %v1689, %v1705
      %v1723 = vcombine.high %v1689, %v1705
      %v1725 = vunpack.c.l.s4 1934713408
      %v1726 = vunpack.c.0.s8 %v1725
      %v1727 = vlaneseq
      %v1728 = vshrl.u32 %v1727, 7
      %v1729 = vsub.s32 %v1726, %v1728
      %v1730 = vrot.slane %v1722, %v1729
      %v1732 = vunpack.c.l.s4 1934713408
      %v1733 = vunpack.c.0.s8 %v1732
      %v1734 = vlaneseq
      %v1735 = vshrl.u32 %v1734, 7
      %v1736 = vsub.s32 %v1733, %v1735
      %v1737 = vrot.slane %v1723, %v1736
      %v1738 = vcombine.high %v1714, 0.0
      %v1739 = vcombine.high %v1721, 0.0
      %v1740 = vcombine.high %v1730, 0.0
      %v1741 = vcombine.high %v1737, 0.0
      %v1742 = vcombine.low %v1650, %v1660
      %v1743 = vcombine.high %v1650, %v1660
      %v1745 = vunpack.c.l.s4 1983009808
      %v1746 = vunpack.c.0.s8 %v1745
      %v1747 = vlaneseq
      %v1748 = vshrl.u32 %v1747, 7
      %v1749 = vsub.s32 %v1746, %v1748
      %v1750 = vrot.slane %v1742, %v1749
      %v1752 = vunpack.c.l.s4 1983009808
      %v1753 = vunpack.c.0.s8 %v1752
      %v1754 = vlaneseq
      %v1755 = vshrl.u32 %v1754, 7
      %v1756 = vsub.s32 %v1753, %v1755
      %v1757 = vrot.slane %v1743, %v1756
      %v1758 = vcombine.low %v1655, %v1665
      %v1759 = vcombine.high %v1655, %v1665
      %v1761 = vunpack.c.l.s4 1983009808
      %v1762 = vunpack.c.0.s8 %v1761
      %v1763 = vlaneseq
      %v1764 = vshrl.u32 %v1763, 7
      %v1765 = vsub.s32 %v1762, %v1764
      %v1766 = vrot.slane %v1758, %v1765
      %v1768 = vunpack.c.l.s4 1983009808
      %v1769 = vunpack.c.0.s8 %v1768
      %v1770 = vlaneseq
      %v1771 = vshrl.u32 %v1770, 7
      %v1772 = vsub.s32 %v1769, %v1771
      %v1773 = vrot.slane %v1759, %v1772
      %v1774 = vcombine.low %v1750, %v1766
      %v1775 = vcombine.high %v1750, %v1766
      %v1777 = vunpack.c.l.s4 1934713408
      %v1778 = vunpack.c.0.s8 %v1777
      %v1779 = vlaneseq
      %v1780 = vshrl.u32 %v1779, 7
      %v1781 = vsub.s32 %v1778, %v1780
      %v1782 = vrot.slane %v1774, %v1781
      %v1784 = vunpack.c.l.s4 1934713408
      %v1785 = vunpack.c.0.s8 %v1784
      %v1786 = vlaneseq
      %v1787 = vshrl.u32 %v1786, 7
      %v1788 = vsub.s32 %v1785, %v1787
      %v1789 = vrot.slane %v1775, %v1788
      %v1790 = vcombine.low %v1757, %v1773
      %v1791 = vcombine.high %v1757, %v1773
      %v1793 = vunpack.c.l.s4 1934713408
      %v1794 = vunpack.c.0.s8 %v1793
      %v1795 = vlaneseq
      %v1796 = vshrl.u32 %v1795, 7
      %v1797 = vsub.s32 %v1794, %v1796
      %v1798 = vrot.slane %v1790, %v1797
      %v1800 = vunpack.c.l.s4 1934713408
      %v1801 = vunpack.c.0.s8 %v1800
      %v1802 = vlaneseq
      %v1803 = vshrl.u32 %v1802, 7
      %v1804 = vsub.s32 %v1801, %v1803
      %v1805 = vrot.slane %v1791, %v1804
      %v1806 = vcombine.high %v1782, 0.0
      %v1807 = vcombine.high %v1789, 0.0
      %v1808 = vcombine.high %v1798, 0.0
      %v1809 = vcombine.high %v1805, 0.0
      %1811 = vrot.lane.b32.xlu0 %v1738, 16
      %v1812 = vpop.permute.xlu0 %1811
      %1815 = vrot.lane.b32.xlu0 %v1721, 32
      %v1816 = vpop.permute.xlu0 %1815
      %1819 = vrot.lane.b32.xlu0 %v1739, 48
      %v1820 = vpop.permute.xlu0 %1819
      %1823 = vrot.lane.b32.xlu0 %v1730, 64
      %v1824 = vpop.permute.xlu0 %1823
      %1827 = vrot.lane.b32.xlu0 %v1740, 80
      %v1828 = vpop.permute.xlu0 %1827
      %1831 = vrot.lane.b32.xlu0 %v1737, 96
      %v1832 = vpop.permute.xlu0 %1831
      %1835 = vrot.lane.b32.xlu0 %v1741, 112
      %v1836 = vpop.permute.xlu0 %1835
      %1839 = vrot.lane.b32.xlu0 %v1806, 16
      %v1840 = vpop.permute.xlu0 %1839
      %1843 = vrot.lane.b32.xlu0 %v1789, 32
      %v1844 = vpop.permute.xlu0 %1843
      %1847 = vrot.lane.b32.xlu0 %v1807, 48
      %v1848 = vpop.permute.xlu0 %1847
      %1851 = vrot.lane.b32.xlu0 %v1798, 64
      %v1852 = vpop.permute.xlu0 %1851
      %1855 = vrot.lane.b32.xlu0 %v1808, 80
      %v1856 = vpop.permute.xlu0 %1855
      %1859 = vrot.lane.b32.xlu0 %v1805, 96
      %v1860 = vpop.permute.xlu0 %1859
      %1863 = vrot.lane.b32.xlu0 %v1809, 112
      %v1864 = vpop.permute.xlu0 %1863
      %v1866 = vsel %vm457, %v1714, %v1812
      %v1867 = vsel %vm459, %v1866, %v1816
      %v1868 = vsel %vm461, %v1867, %v1820
      %v1869 = vsel %vm463, %v1868, %v1824
      %v1870 = vsel %vm465, %v1869, %v1828
      %v1871 = vsel %vm467, %v1870, %v1832
      %v1872 = vsel %vm469, %v1871, %v1836
      %v1873 = vsel %vm457, %v1782, %v1840
      %v1874 = vsel %vm459, %v1873, %v1844
      %v1875 = vsel %vm461, %v1874, %v1848
      %v1876 = vsel %vm463, %v1875, %v1852
      %v1877 = vsel %vm465, %v1876, %v1856
      %v1878 = vsel %vm467, %v1877, %v1860
      %v1879 = vsel %vm469, %v1878, %v1864
      %1880 = vrot.lane.b32.xlu0 %v1648, 127
      %v1881 = vpop.permute.xlu0 %1880
      %1882 = vrot.lane.b32.xlu0 %v1650, 127
      %v1883 = vpop.permute.xlu0 %1882
      %1884 = vrot.lane.b32.xlu0 %v1653, 127
      %v1885 = vpop.permute.xlu0 %1884
      %1886 = vrot.lane.b32.xlu0 %v1655, 127
      %v1887 = vpop.permute.xlu0 %1886
      %1888 = vrot.lane.b32.xlu0 %v1658, 127
      %v1889 = vpop.permute.xlu0 %1888
      %1890 = vrot.lane.b32.xlu0 %v1660, 127
      %v1891 = vpop.permute.xlu0 %1890
      %1892 = vrot.lane.b32.xlu0 %v1663, 127
      %v1893 = vpop.permute.xlu0 %1892
      %1894 = vrot.lane.b32.xlu0 %v1665, 127
      %v1895 = vpop.permute.xlu0 %1894
      %v1904 = vcombine.low %v1881, %v1889
      %v1905 = vcombine.high %v1881, %v1889
      %v1907 = vunpack.c.l.s4 1983009808
      %v1908 = vunpack.c.0.s8 %v1907
      %v1909 = vlaneseq
      %v1910 = vshrl.u32 %v1909, 7
      %v1911 = vsub.s32 %v1908, %v1910
      %v1912 = vrot.slane %v1904, %v1911
      %v1914 = vunpack.c.l.s4 1983009808
      %v1915 = vunpack.c.0.s8 %v1914
      %v1916 = vlaneseq
      %v1917 = vshrl.u32 %v1916, 7
      %v1918 = vsub.s32 %v1915, %v1917
      %v1919 = vrot.slane %v1905, %v1918
      %v1920 = vcombine.low %v1885, %v1893
      %v1921 = vcombine.high %v1885, %v1893
      %v1923 = vunpack.c.l.s4 1983009808
      %v1924 = vunpack.c.0.s8 %v1923
      %v1925 = vlaneseq
      %v1926 = vshrl.u32 %v1925, 7
      %v1927 = vsub.s32 %v1924, %v1926
      %v1928 = vrot.slane %v1920, %v1927
      %v1930 = vunpack.c.l.s4 1983009808
      %v1931 = vunpack.c.0.s8 %v1930
      %v1932 = vlaneseq
      %v1933 = vshrl.u32 %v1932, 7
      %v1934 = vsub.s32 %v1931, %v1933
      %v1935 = vrot.slane %v1921, %v1934
      %v1936 = vcombine.low %v1912, %v1928
      %v1937 = vcombine.high %v1912, %v1928
      %v1939 = vunpack.c.l.s4 1934713408
      %v1940 = vunpack.c.0.s8 %v1939
      %v1941 = vlaneseq
      %v1942 = vshrl.u32 %v1941, 7
      %v1943 = vsub.s32 %v1940, %v1942
      %v1944 = vrot.slane %v1936, %v1943
      %v1946 = vunpack.c.l.s4 1934713408
      %v1947 = vunpack.c.0.s8 %v1946
      %v1948 = vlaneseq
      %v1949 = vshrl.u32 %v1948, 7
      %v1950 = vsub.s32 %v1947, %v1949
      %v1951 = vrot.slane %v1937, %v1950
      %v1952 = vcombine.low %v1919, %v1935
      %v1953 = vcombine.high %v1919, %v1935
      %v1955 = vunpack.c.l.s4 1934713408
      %v1956 = vunpack.c.0.s8 %v1955
      %v1957 = vlaneseq
      %v1958 = vshrl.u32 %v1957, 7
      %v1959 = vsub.s32 %v1956, %v1958
      %v1960 = vrot.slane %v1952, %v1959
      %v1962 = vunpack.c.l.s4 1934713408
      %v1963 = vunpack.c.0.s8 %v1962
      %v1964 = vlaneseq
      %v1965 = vshrl.u32 %v1964, 7
      %v1966 = vsub.s32 %v1963, %v1965
      %v1967 = vrot.slane %v1953, %v1966
      %v1968 = vcombine.high %v1944, 0.0
      %v1969 = vcombine.high %v1951, 0.0
      %v1970 = vcombine.high %v1960, 0.0
      %v1971 = vcombine.high %v1967, 0.0
      %v1972 = vcombine.low %v1883, %v1891
      %v1973 = vcombine.high %v1883, %v1891
      %v1975 = vunpack.c.l.s4 1983009808
      %v1976 = vunpack.c.0.s8 %v1975
      %v1977 = vlaneseq
      %v1978 = vshrl.u32 %v1977, 7
      %v1979 = vsub.s32 %v1976, %v1978
      %v1980 = vrot.slane %v1972, %v1979
      %v1982 = vunpack.c.l.s4 1983009808
      %v1983 = vunpack.c.0.s8 %v1982
      %v1984 = vlaneseq
      %v1985 = vshrl.u32 %v1984, 7
      %v1986 = vsub.s32 %v1983, %v1985
      %v1987 = vrot.slane %v1973, %v1986
      %v1988 = vcombine.low %v1887, %v1895
      %v1989 = vcombine.high %v1887, %v1895
      %v1991 = vunpack.c.l.s4 1983009808
      %v1992 = vunpack.c.0.s8 %v1991
      %v1993 = vlaneseq
      %v1994 = vshrl.u32 %v1993, 7
      %v1995 = vsub.s32 %v1992, %v1994
      %v1996 = vrot.slane %v1988, %v1995
      %v1998 = vunpack.c.l.s4 1983009808
      %v1999 = vunpack.c.0.s8 %v1998
      %v2000 = vlaneseq
      %v2001 = vshrl.u32 %v2000, 7
      %v2002 = vsub.s32 %v1999, %v2001
      %v2003 = vrot.slane %v1989, %v2002
      %v2004 = vcombine.low %v1980, %v1996
      %v2005 = vcombine.high %v1980, %v1996
      %v2007 = vunpack.c.l.s4 1934713408
      %v2008 = vunpack.c.0.s8 %v2007
      %v2009 = vlaneseq
      %v2010 = vshrl.u32 %v2009, 7
      %v2011 = vsub.s32 %v2008, %v2010
      %v2012 = vrot.slane %v2004, %v2011
      %v2014 = vunpack.c.l.s4 1934713408
      %v2015 = vunpack.c.0.s8 %v2014
      %v2016 = vlaneseq
      %v2017 = vshrl.u32 %v2016, 7
      %v2018 = vsub.s32 %v2015, %v2017
      %v2019 = vrot.slane %v2005, %v2018
      %v2020 = vcombine.low %v1987, %v2003
      %v2021 = vcombine.high %v1987, %v2003
      %v2023 = vunpack.c.l.s4 1934713408
      %v2024 = vunpack.c.0.s8 %v2023
      %v2025 = vlaneseq
      %v2026 = vshrl.u32 %v2025, 7
      %v2027 = vsub.s32 %v2024, %v2026
      %v2028 = vrot.slane %v2020, %v2027
      %v2030 = vunpack.c.l.s4 1934713408
      %v2031 = vunpack.c.0.s8 %v2030
      %v2032 = vlaneseq
      %v2033 = vshrl.u32 %v2032, 7
      %v2034 = vsub.s32 %v2031, %v2033
      %v2035 = vrot.slane %v2021, %v2034
      %v2036 = vcombine.high %v2012, 0.0
      %v2037 = vcombine.high %v2019, 0.0
      %v2038 = vcombine.high %v2028, 0.0
      %v2039 = vcombine.high %v2035, 0.0
      %2041 = vrot.lane.b32.xlu0 %v1968, 16
      %v2042 = vpop.permute.xlu0 %2041
      %2045 = vrot.lane.b32.xlu0 %v1951, 32
      %v2046 = vpop.permute.xlu0 %2045
      %2049 = vrot.lane.b32.xlu0 %v1969, 48
      %v2050 = vpop.permute.xlu0 %2049
      %2053 = vrot.lane.b32.xlu0 %v1960, 64
      %v2054 = vpop.permute.xlu0 %2053
      %2057 = vrot.lane.b32.xlu0 %v1970, 80
      %v2058 = vpop.permute.xlu0 %2057
      %2061 = vrot.lane.b32.xlu0 %v1967, 96
      %v2062 = vpop.permute.xlu0 %2061
      %2065 = vrot.lane.b32.xlu0 %v1971, 112
      %v2066 = vpop.permute.xlu0 %2065
      %2069 = vrot.lane.b32.xlu0 %v2036, 16
      %v2070 = vpop.permute.xlu0 %2069
      %2073 = vrot.lane.b32.xlu0 %v2019, 32
      %v2074 = vpop.permute.xlu0 %2073
      %2077 = vrot.lane.b32.xlu0 %v2037, 48
      %v2078 = vpop.permute.xlu0 %2077
      %2081 = vrot.lane.b32.xlu0 %v2028, 64
      %v2082 = vpop.permute.xlu0 %2081
      %2085 = vrot.lane.b32.xlu0 %v2038, 80
      %v2086 = vpop.permute.xlu0 %2085
      %2089 = vrot.lane.b32.xlu0 %v2035, 96
      %v2090 = vpop.permute.xlu0 %2089
      %2093 = vrot.lane.b32.xlu0 %v2039, 112
      %v2094 = vpop.permute.xlu0 %2093
      %v2096 = vsel %vm457, %v1944, %v2042
      %v2097 = vsel %vm459, %v2096, %v2046
      %v2098 = vsel %vm461, %v2097, %v2050
      %v2099 = vsel %vm463, %v2098, %v2054
      %v2100 = vsel %vm465, %v2099, %v2058
      %v2101 = vsel %vm467, %v2100, %v2062
      %v2102 = vsel %vm469, %v2101, %v2066
      %v2103 = vsel %vm457, %v2012, %v2070
      %v2104 = vsel %vm459, %v2103, %v2074
      %v2105 = vsel %vm461, %v2104, %v2078
      %v2106 = vsel %vm463, %v2105, %v2082
      %v2107 = vsel %vm465, %v2106, %v2086
      %v2108 = vsel %vm467, %v2107, %v2090
      %v2109 = vsel %vm469, %v2108, %v2094
      %2110 = vrot.lane.b32.xlu0 %v1648, 126
      %v2111 = vpop.permute.xlu0 %2110
      %2112 = vrot.lane.b32.xlu0 %v1650, 126
      %v2113 = vpop.permute.xlu0 %2112
      %2114 = vrot.lane.b32.xlu0 %v1653, 126
      %v2115 = vpop.permute.xlu0 %2114
      %2116 = vrot.lane.b32.xlu0 %v1655, 126
      %v2117 = vpop.permute.xlu0 %2116
      %2118 = vrot.lane.b32.xlu0 %v1658, 126
      %v2119 = vpop.permute.xlu0 %2118
      %2120 = vrot.lane.b32.xlu0 %v1660, 126
      %v2121 = vpop.permute.xlu0 %2120
      %2122 = vrot.lane.b32.xlu0 %v1663, 126
      %v2123 = vpop.permute.xlu0 %2122
      %2124 = vrot.lane.b32.xlu0 %v1665, 126
      %v2125 = vpop.permute.xlu0 %2124
      %v2134 = vcombine.low %v2111, %v2119
      %v2135 = vcombine.high %v2111, %v2119
      %v2137 = vunpack.c.l.s4 1983009808
      %v2138 = vunpack.c.0.s8 %v2137
      %v2139 = vlaneseq
      %v2140 = vshrl.u32 %v2139, 7
      %v2141 = vsub.s32 %v2138, %v2140
      %v2142 = vrot.slane %v2134, %v2141
      %v2144 = vunpack.c.l.s4 1983009808
      %v2145 = vunpack.c.0.s8 %v2144
      %v2146 = vlaneseq
      %v2147 = vshrl.u32 %v2146, 7
      %v2148 = vsub.s32 %v2145, %v2147
      %v2149 = vrot.slane %v2135, %v2148
      %v2150 = vcombine.low %v2115, %v2123
      %v2151 = vcombine.high %v2115, %v2123
      %v2153 = vunpack.c.l.s4 1983009808
      %v2154 = vunpack.c.0.s8 %v2153
      %v2155 = vlaneseq
      %v2156 = vshrl.u32 %v2155, 7
      %v2157 = vsub.s32 %v2154, %v2156
      %v2158 = vrot.slane %v2150, %v2157
      %v2160 = vunpack.c.l.s4 1983009808
      %v2161 = vunpack.c.0.s8 %v2160
      %v2162 = vlaneseq
      %v2163 = vshrl.u32 %v2162, 7
      %v2164 = vsub.s32 %v2161, %v2163
      %v2165 = vrot.slane %v2151, %v2164
      %v2166 = vcombine.low %v2142, %v2158
      %v2167 = vcombine.high %v2142, %v2158
      %v2169 = vunpack.c.l.s4 1934713408
      %v2170 = vunpack.c.0.s8 %v2169
      %v2171 = vlaneseq
      %v2172 = vshrl.u32 %v2171, 7
      %v2173 = vsub.s32 %v2170, %v2172
      %v2174 = vrot.slane %v2166, %v2173
      %v2176 = vunpack.c.l.s4 1934713408
      %v2177 = vunpack.c.0.s8 %v2176
      %v2178 = vlaneseq
      %v2179 = vshrl.u32 %v2178, 7
      %v2180 = vsub.s32 %v2177, %v2179
      %v2181 = vrot.slane %v2167, %v2180
      %v2182 = vcombine.low %v2149, %v2165
      %v2183 = vcombine.high %v2149, %v2165
      %v2185 = vunpack.c.l.s4 1934713408
      %v2186 = vunpack.c.0.s8 %v2185
      %v2187 = vlaneseq
      %v2188 = vshrl.u32 %v2187, 7
      %v2189 = vsub.s32 %v2186, %v2188
      %v2190 = vrot.slane %v2182, %v2189
      %v2192 = vunpack.c.l.s4 1934713408
      %v2193 = vunpack.c.0.s8 %v2192
      %v2194 = vlaneseq
      %v2195 = vshrl.u32 %v2194, 7
      %v2196 = vsub.s32 %v2193, %v2195
      %v2197 = vrot.slane %v2183, %v2196
      %v2198 = vcombine.high %v2174, 0.0
      %v2199 = vcombine.high %v2181, 0.0
      %v2200 = vcombine.high %v2190, 0.0
      %v2201 = vcombine.high %v2197, 0.0
      %v2202 = vcombine.low %v2113, %v2121
      %v2203 = vcombine.high %v2113, %v2121
      %v2205 = vunpack.c.l.s4 1983009808
      %v2206 = vunpack.c.0.s8 %v2205
      %v2207 = vlaneseq
      %v2208 = vshrl.u32 %v2207, 7
      %v2209 = vsub.s32 %v2206, %v2208
      %v2210 = vrot.slane %v2202, %v2209
      %v2212 = vunpack.c.l.s4 1983009808
      %v2213 = vunpack.c.0.s8 %v2212
      %v2214 = vlaneseq
      %v2215 = vshrl.u32 %v2214, 7
      %v2216 = vsub.s32 %v2213, %v2215
      %v2217 = vrot.slane %v2203, %v2216
      %v2218 = vcombine.low %v2117, %v2125
      %v2219 = vcombine.high %v2117, %v2125
      %v2221 = vunpack.c.l.s4 1983009808
      %v2222 = vunpack.c.0.s8 %v2221
      %v2223 = vlaneseq
      %v2224 = vshrl.u32 %v2223, 7
      %v2225 = vsub.s32 %v2222, %v2224
      %v2226 = vrot.slane %v2218, %v2225
      %v2228 = vunpack.c.l.s4 1983009808
      %v2229 = vunpack.c.0.s8 %v2228
      %v2230 = vlaneseq
      %v2231 = vshrl.u32 %v2230, 7
      %v2232 = vsub.s32 %v2229, %v2231
      %v2233 = vrot.slane %v2219, %v2232
      %v2234 = vcombine.low %v2210, %v2226
      %v2235 = vcombine.high %v2210, %v2226
      %v2237 = vunpack.c.l.s4 1934713408
      %v2238 = vunpack.c.0.s8 %v2237
      %v2239 = vlaneseq
      %v2240 = vshrl.u32 %v2239, 7
      %v2241 = vsub.s32 %v2238, %v2240
      %v2242 = vrot.slane %v2234, %v2241
      %v2244 = vunpack.c.l.s4 1934713408
      %v2245 = vunpack.c.0.s8 %v2244
      %v2246 = vlaneseq
      %v2247 = vshrl.u32 %v2246, 7
      %v2248 = vsub.s32 %v2245, %v2247
      %v2249 = vrot.slane %v2235, %v2248
      %v2250 = vcombine.low %v2217, %v2233
      %v2251 = vcombine.high %v2217, %v2233
      %v2253 = vunpack.c.l.s4 1934713408
      %v2254 = vunpack.c.0.s8 %v2253
      %v2255 = vlaneseq
      %v2256 = vshrl.u32 %v2255, 7
      %v2257 = vsub.s32 %v2254, %v2256
      %v2258 = vrot.slane %v2250, %v2257
      %v2260 = vunpack.c.l.s4 1934713408
      %v2261 = vunpack.c.0.s8 %v2260
      %v2262 = vlaneseq
      %v2263 = vshrl.u32 %v2262, 7
      %v2264 = vsub.s32 %v2261, %v2263
      %v2265 = vrot.slane %v2251, %v2264
      %v2266 = vcombine.high %v2242, 0.0
      %v2267 = vcombine.high %v2249, 0.0
      %v2268 = vcombine.high %v2258, 0.0
      %v2269 = vcombine.high %v2265, 0.0
      %2271 = vrot.lane.b32.xlu0 %v2198, 16
      %v2272 = vpop.permute.xlu0 %2271
      %2275 = vrot.lane.b32.xlu0 %v2181, 32
      %v2276 = vpop.permute.xlu0 %2275
      %2279 = vrot.lane.b32.xlu0 %v2199, 48
      %v2280 = vpop.permute.xlu0 %2279
      %2283 = vrot.lane.b32.xlu0 %v2190, 64
      %v2284 = vpop.permute.xlu0 %2283
      %2287 = vrot.lane.b32.xlu0 %v2200, 80
      %v2288 = vpop.permute.xlu0 %2287
      %2291 = vrot.lane.b32.xlu0 %v2197, 96
      %v2292 = vpop.permute.xlu0 %2291
      %2295 = vrot.lane.b32.xlu0 %v2201, 112
      %v2296 = vpop.permute.xlu0 %2295
      %2299 = vrot.lane.b32.xlu0 %v2266, 16
      %v2300 = vpop.permute.xlu0 %2299
      %2303 = vrot.lane.b32.xlu0 %v2249, 32
      %v2304 = vpop.permute.xlu0 %2303
      %2307 = vrot.lane.b32.xlu0 %v2267, 48
      %v2308 = vpop.permute.xlu0 %2307
      %2311 = vrot.lane.b32.xlu0 %v2258, 64
      %v2312 = vpop.permute.xlu0 %2311
      %2315 = vrot.lane.b32.xlu0 %v2268, 80
      %v2316 = vpop.permute.xlu0 %2315
      %2319 = vrot.lane.b32.xlu0 %v2265, 96
      %v2320 = vpop.permute.xlu0 %2319
      %2323 = vrot.lane.b32.xlu0 %v2269, 112
      %v2324 = vpop.permute.xlu0 %2323
      %v2326 = vsel %vm457, %v2174, %v2272
      %v2327 = vsel %vm459, %v2326, %v2276
      %v2328 = vsel %vm461, %v2327, %v2280
      %v2329 = vsel %vm463, %v2328, %v2284
      %v2330 = vsel %vm465, %v2329, %v2288
      %v2331 = vsel %vm467, %v2330, %v2292
      %v2332 = vsel %vm469, %v2331, %v2296
      %v2333 = vsel %vm457, %v2242, %v2300
      %v2334 = vsel %vm459, %v2333, %v2304
      %v2335 = vsel %vm461, %v2334, %v2308
      %v2336 = vsel %vm463, %v2335, %v2312
      %v2337 = vsel %vm465, %v2336, %v2316
      %v2338 = vsel %vm467, %v2337, %v2320
      %v2339 = vsel %vm469, %v2338, %v2324
      %v2342 = vrot.slane %v708, 4
      %v2343 = vrot.slane %v715, 4
      %v2348 = vrot.slane %v1177, 4
      %v2349 = vrot.slane %v1184, 4
      %v2354 = vrot.slane %v1637, 4
      %v2355 = vrot.slane %v1644, 4
      %v2360 = vrot.slane %v2102, 4
      %v2361 = vrot.slane %v2109, 4
      %vm2364 = vcmask 1043456
      %v2365 = vsel %vm2364, %v470, %v2342
      %v2366 = vsel %vm2364, %v477, %v2343
      %v2367 = vsel %vm2364, %v938, %v2348
      %v2368 = vsel %vm2364, %v945, %v2349
      %v2369 = vsel %vm2364, %v1407, %v2354
      %v2370 = vsel %vm2364, %v1414, %v2355
      %v2371 = vsel %vm2364, %v1872, %v2360
      %v2372 = vsel %vm2364, %v1879, %v2361
      %v2373 = vld [vmem:[%s1] sm:$0xff]
      %vm2374 = vcmask 293888
      %v2376 = vsel %vm2374, %v2373, 0
      %v2379 = vsel %vm2364, %v2332, 0
      %v2382 = vsel %vm2364, %v2339, 0
      %2384 = vmatprep.subr.mxu0 %v2366
      %2385 = vmatpush1.msra.mxu0 %v2365
      %2386 = vmatprep.subr.mxu0 %v2368
      %2387 = vmatpush1.msra.mxu0 %v2367
      %2388 = vmatprep.subr.mxu0 %v2370
      %2389 = vmatpush1.msra.mxu0 %v2369
      %2390 = vmatprep.subr.mxu0 %v2372
      %2391 = vmatpush1.msra.mxu0 %v2371
      %2392 = vmatprep.subr.mxu0 %v2382
      %2393 = vmatpush1.msra.mxu0 %v2379
      %2394 = vmatprep.subr.mxu0 0.0
      %2395 = vmatpush1.msra.mxu0 0.0
      %2396 = vmatprep.subr.mxu0 0.0
      %2397 = vmatpush1.msra.mxu0 0.0
      %2398 = vmatprep.subr.mxu0 0.0
      %2399 = vmatpush1.msra.mxu0 0.0
      %2400 = vmatprep.subr.mxu0 0.0
      %2401 = vmatpush1.msra.mxu0 0.0
      %2402 = vmatprep.subr.mxu0 0.0
      %2403 = vmatpush1.msra.mxu0 0.0
      %2404 = vmatprep.subr.mxu0 0.0
      %2405 = vmatpush1.msra.mxu0 0.0
      %2406 = vmatprep.subr.mxu0 0.0
      %2407 = vmatpush1.msra.mxu0 0.0
      %2408 = vmatprep.subr.mxu0 0.0
      %2409 = vmatpush1.msra.mxu0 0.0
      %2410 = vmatprep.subr.mxu0 0.0
      %2411 = vmatpush1.msra.mxu0 0.0
      %2412 = vmatprep.subr.mxu0 0.0
      %2413 = vmatpush1.msra.mxu0 0.0
      %2414 = vmatprep.subr.mxu0 0.0
      %2415 = vmatpush1.msra.mxu0 0.0
      %2416 = vmatprep.subr.mxu0 0.0
      %2417 = vmatpush1.msra.mxu0 0.0
      %2418 = vmatprep.subr.mxu0 0.0
      %2419 = vmatpush1.msra.mxu0 0.0
      %2420 = vmatprep.subr.mxu0 0.0
      %2421 = vmatpush1.msra.mxu0 0.0
      %2422 = vmatprep.subr.mxu0 0.0
      %2423 = vmatpush1.msra.mxu0 0.0
      %2424 = vmatprep.subr.mxu0 0.0
      %2425 = vmatpush1.msra.mxu0 0.0
      %2426 = vmatprep.subr.mxu0 0.0
      %2427 = vmatpush1.msra.mxu0 0.0
      %2428 = vmatprep.subr.mxu0 0.0
      %2429 = vmatpush1.msra.mxu0 0.0
      %2430 = vmatprep.subr.mxu0 0.0
      %2431 = vmatpush1.msra.mxu0 0.0
      %2432 = vmatprep.subr.mxu0 0.0
      %2433 = vmatpush1.msra.mxu0 0.0
      %2434 = vmatprep.subr.mxu0 0.0
      %2435 = vmatpush1.msra.mxu0 0.0
      %2436 = vmatprep.subr.mxu0 0.0
      %2437 = vmatpush1.msra.mxu0 0.0
      %2438 = vmatprep.subr.mxu0 0.0
      %2439 = vmatpush1.msra.mxu0 0.0
      %2440 = vmatprep.subr.mxu0 0.0
      %2441 = vmatpush1.msra.mxu0 0.0
      %2442 = vmatprep.subr.mxu0 0.0
      %2443 = vmatpush1.msra.mxu0 0.0
      %2444 = vmatprep.subr.mxu0 0.0
      %2445 = vmatpush1.msra.mxu0 0.0
      %2446 = vmatprep.subr.mxu0 0.0
      %2447 = vmatpush1.msra.mxu0 0.0
      %2448 = vmatprep.mubr.f32.mxu0 0.0
      %2449 = vmatmul.mubr.f32.gmra.mrb[0].mxu0 %v2376
      %v2450 = vpop.f32.mrb[0].mxu0
      %v2451 = vadd.f32 0.0, %v2450
      %v2452 = vpop.f32.mrb[0].mxu0
      %v2453 = vadd.f32 0.0, %v2452
      %2454 = vdwg.mxu0
      %v2455 = vld [vmem:[#allocation3] sm:$0xff]
      %v2456 = vadd.f32 %v2451, %v2453
      %2457 = vadd.xlane.f32.xlu0 %v2456
      %v2458 = vpop.xlane.xlu0 %2457
      %v2459 = vadd.f32 %v2455, %v2458
      %vm2460 = vcmask 7168
      %2461 = vst.msk [vmem:[#allocation3] sm:$0xff] %vm2460, %v2459
      %v2462 = vld [vmem:[#allocation4] sm:$0xff]
      %v2463 = vmul.f32 %v2451, %v2451
      %v2464 = vmul.f32 %v2453, %v2453
      %v2465 = vadd.f32 %v2463, %v2464
      %2466 = vadd.xlane.f32.xlu0 %v2465
      %v2467 = vpop.xlane.xlu0 %2466
      %v2468 = vadd.f32 %v2462, %v2467
      %2469 = vst.msk [vmem:[#allocation4] sm:$0xff] %vm2460, %v2468
      %s2470 = smul.u32 %s15, 2
      %s2471 = smul.addr %s2470, 8
      %s2472 = scalar_lea.vmem %s4, %s2471
      %2473 = vst [vmem:[%s2472] sm:$0xff] %v2451
      %2474 = vst [vmem:[%s2472 + $0x8] sm:$0xff] %v2453
      %p2475 = scmp.eq.s32.totalorder %s15, 1
      // Predicated region
      $region41: #{conv_block22_forward.1} parent=35 // pred_check
        %p2476 = pneg %p2475
      $region42: #{conv_block22_forward.1} parent=35 // pred_check_branch
        %2478 = sbr.rel (%p2476) target = $region44
      $region43: #{conv_block22_forward.1} parent=35 // pred_region
        %v2479 = vld [vmem:[#allocation3] sm:$0xff]
        %v2480 = vrcp.pop 512.0
        %v2481 = vmul.f32 %v2479, %v2480
        %v2482 = vld [vmem:[#allocation4] sm:$0xff]
        %v2483 = vmul.f32 %v2482, %v2480
        %v2484 = vmul.f32 %v2481, %v2481
        %v2485 = vsub.f32 %v2483, %v2484
        %v2486 = vmax.f32 %v2485, 0.0
        %v2487 = vadd.f32 %v2486, 1e-05
        %v2488 = vrsqrt.pop %v2487
        %v2489 = vld [vmem:[%s2] sm:$0xff]
        %v2490 = vmul.f32 %v2489, %v2488
        %v2491 = vld [vmem:[%s3] sm:$0xff]
        %v2492 = vmul.f32 %v2481, %v2489
        %v2493 = vmul.f32 %v2492, %v2488
        %v2494 = vsub.f32 %v2491, %v2493
        %v2495 = vld [vmem:[%s4] sm:$0xff]
        %v2496 = vld [vmem:[%s4 + $0x8] sm:$0xff]
        %v2497 = vld [vmem:[%s4 + $0x10] sm:$0xff]
        %v2498 = vld [vmem:[%s4 + $0x18] sm:$0xff]
        %2500 = vset.pattern.permute.xlu0 0
        %2501 = vperm.xlu0 %2500, %v2490
        %v2502 = vpop.permute.xlu0 %2501
        %v2504 = vmul.f32 %v2495, %v2502
        %v2505 = vmul.f32 %v2496, %v2502
        %v2506 = vmul.f32 %v2497, %v2502
        %v2507 = vmul.f32 %v2498, %v2502
        %2509 = vset.pattern.permute.xlu0 0
        %2510 = vperm.xlu0 %2509, %v2494
        %v2511 = vpop.permute.xlu0 %2510
        %v2513 = vadd.f32 %v2504, %v2511
        %v2514 = vadd.f32 %v2505, %v2511
        %v2515 = vadd.f32 %v2506, %v2511
        %v2516 = vadd.f32 %v2507, %v2511
        %v2517 = vmax.f32 %v2513, 0.0
        %v2518 = vmax.f32 %v2514, 0.0
        %v2519 = vmax.f32 %v2515, 0.0
        %v2520 = vmax.f32 %v2516, 0.0
        %2521 = vst [vmem:[%s4] sm:$0xff] %v2517
        %2522 = vst [vmem:[%s4 + $0x8] sm:$0xff] %v2518
        %2523 = vst [vmem:[%s4 + $0x10] sm:$0xff] %v2519
        %2524 = vst [vmem:[%s4 + $0x18] sm:$0xff] %v2520
      $region44: #{conv_block22_forward.1} parent=35 // pred_fallthru
        _
      // Predicated region
      $region45: #{conv_block22_forward.1} parent=35 // pred_check
        %p2525 = pneg %p117
      $region46: #{conv_block22_forward.1} parent=35 // pred_check_branch
        %2527 = sbr.rel (%p2525) target = $region48
      $region47: #{conv_block22_forward.1} parent=35 // pred_region
        _
      $region48: #{conv_block22_forward.1} parent=35 // pred_fallthru
        _
      // Predicated region
      $region49: #{conv_block22_forward.1} parent=35 // pred_check
        %p2528 = pneg %p117
      $region50: #{conv_block22_forward.1} parent=35 // pred_check_branch
        %2530 = sbr.rel (%p2528) target = $region52
      $region51: #{conv_block22_forward.1} parent=35 // pred_region
        _
      $region52: #{conv_block22_forward.1} parent=35 // pred_fallthru
        _
    $region36: #{conv_block22_forward.1} parent=5 // pred_fallthru
      _
    %p2531 = scmp.le.s32.totalorder 2, %s10
    // Predicated region
    $region53: #{conv_block22_forward.1} parent=5 // pred_check
      %p2532 = pneg %p2531
    $region54: #{conv_block22_forward.1} parent=5 // pred_check_branch
      %2534 = sbr.rel (%p2532) target = $region56
    $region55: #{conv_block22_forward.1} parent=5 // pred_region
      %s2535 = ssub.s32 %s10, 2
    $region56: #{conv_block22_forward.1} parent=5 // pred_fallthru
      _
  $region6: #{conv_block22_forward.1} parent=0 // loop_footer
    %s14 = sadd.s32 1, %s10
  $region7: #{conv_block22_forward.1} parent=0 // loop_footer_branch
    %9 = sbr.rel target = $region3
  $region8: #{conv_block22_forward.1} parent=0 // loop_exit
    _

</llo_original>
